<compile_context>
chip_gen: v7x
topology: tpu7x:2x2x1
jax: 0.10.0
libtpu: 0.0.40
codegen_flags: <defaults>
</compile_context>

<pallas_src>
import functools
import math

import numpy as np
import jax
import jax.numpy as jnp
from jax import lax
from jax.experimental import pallas as pl
from jax.experimental.pallas import tpu as pltpu


def _cbc_kernel(xstart_ref, inv_dx_ref, poly_ref, x_ref, out_ref, idx_ref, *,
                n_seg: int, k: int, d: int, tr: int, sr: int):
    """One grid step: evaluate a (tr, 128) lane-dense tile, strip-mined in sr-row strips."""
    kp1 = k + 1
    n_strips = tr // sr

    # Hoist every SMEM scalar read out of the strip loop (loop-invariant scalars).
    xs = [xstart_ref[j] for j in range(n_seg)]
    inv = [inv_dx_ref[j] for j in range(n_seg)]
    # co[c][i][j] : coefficient of s**i for channel c on segment j (power basis).
    co = [[[poly_ref[(j * kp1 + i) * d + c] for j in range(n_seg)]
           for i in range(kp1)] for c in range(d)]

    def strip(r, carry):
        off = pl.multiple_of(r * sr, sr)
        x = x_ref[pl.ds(off, sr), :]                       # (sr, 128), points on lanes

        # torch.bucketize(x, xstart, right=True) - 1 == (# of xstart[j] <= x) - 1.
        # ge[j] is monotone: ge[0] >= ge[1] >= ... ; reused below for the gathers.
        ge = [x >= xs[j] for j in range(n_seg)]
        cnt = ge[0].astype(jnp.int32)
        for j in range(1, n_seg):
            cnt = cnt + ge[j].astype(jnp.int32)
        idx_ref[pl.ds(off, sr), :] = cnt - 1               # -1 for x < xstart[0] (torch)

        # One-hot gather via the ordered ge chain.  If all ge are false (idx == -1)
        # the chain falls through to the LAST segment, matching torch's negative wrap.
        def gather(vals):
            g = jnp.where(ge[0], vals[0], vals[n_seg - 1])
            for j in range(1, n_seg):
                g = jnp.where(ge[j], vals[j], g)
            return g

        # Local Bezier parameter (reciprocal precomputed in the wrapper: no divides).
        s = (x - gather(xs)) * gather(inv)

        # Horner in the power basis of s, one channel at a time; each finished channel
        # is stored immediately so it never stays live across channels.
        for c in range(d):
            acc = gather(co[c][k])
            for i in range(k - 1, -1, -1):
                acc = acc * s + gather(co[c][i])
            out_ref[c, pl.ds(off, sr), :] = acc
        return carry

    lax.fori_loop(0, n_strips, strip, 0)


def composite_bezier_eval_pallas(x_knots, control_points, x_eval, *,
                                 points_per_block=65536, soa_output=False):
    """Pallas implementation of CompositeBezierCurve.forward.

    x_knots:        (n_seg + 1,) ascending knot positions          (module's `x`)
    control_points: (n_seg, k + 1, d)                               (module's parameter)
    x_eval:         arbitrary shape, evaluation positions
    returns: (eval of shape x_eval.shape + (d,),  idx of shape x_eval.shape)
             with soa_output=True the eval is returned as (d,) + x_eval.shape
             (lane-dense, skips the wrapper-side transpose).
    """
    x_knots = jnp.asarray(x_knots, jnp.float32)
    control_points = jnp.asarray(control_points, jnp.float32)
    x_eval = jnp.asarray(x_eval, jnp.float32)

    n_seg, kp1, d = control_points.shape
    k = kp1 - 1

    xstart = x_knots[:-1]
    dx = x_knots[1:] - x_knots[:-1]
    inv_dx = 1.0 / dx                                      # precomputed reciprocal

    # Bernstein -> power-basis (monomial in local s) conversion, once, in the wrapper:
    #   a_i = sum_m (-1)^(i-m) C(k,i) C(i,m) P_m
    conv = np.zeros((kp1, kp1), np.float64)
    for i in range(kp1):
        for mm in range(i + 1):
            conv[i, mm] = ((-1.0) ** (i - mm)) * math.comb(k, i) * math.comb(i, mm)
    poly = jnp.einsum('im,jmd->jid', jnp.asarray(conv, jnp.float32), control_points)
    poly_flat = poly.reshape(-1)                           # flat 1-D SMEM table

    orig_shape = x_eval.shape
    flat = x_eval.reshape(-1)
    m = flat.shape[0]
    if m == 0:
        idx0 = jnp.zeros(orig_shape, jnp.int32)
        if soa_output:
            return jnp.zeros((d,) + orig_shape, jnp.float32), idx0
        return jnp.zeros(orig_shape + (d,), jnp.float32), idx0

    lanes = 128
    rows_raw = -(-m // lanes)                              # ceil(m / 128)
    tr = max(8, (points_per_block // lanes) // 8 * 8)      # target rows per block
    if rows_raw > 8:
        # keep at least 2 grid steps so both v7x TensorCores get work
        half = max(8, (((rows_raw + 1) // 2) + 7) // 8 * 8)
        tr = min(tr, half)
    rows = -(-rows_raw // tr) * tr
    m_pad = rows * lanes
    if m_pad != m:
        pad = jnp.full((m_pad - m,), x_knots[0], flat.dtype)   # in-domain pad value
        flat = jnp.concatenate([flat, pad])
    x2d = flat.reshape(rows, lanes)                        # points on the lane axis

    # Strip size inside the block: big enough to hide scalar/loop overhead, small
    # enough that the per-strip live set stays well inside the 64-vreg file.
    if tr % 32 == 0:
        sr = 32
    elif tr % 16 == 0:
        sr = 16
    else:
        sr = 8

    grid = (rows // tr,)
    kernel = functools.partial(_cbc_kernel, n_seg=n_seg, k=k, d=d, tr=tr, sr=sr)

    out_ld, idx2d = pl.pallas_call(
        kernel,
        out_shape=(
            jax.ShapeDtypeStruct((d, rows, lanes), jnp.float32),   # lane-dense curve
            jax.ShapeDtypeStruct((rows, lanes), jnp.int32),        # lane-dense idx
        ),
        grid_spec=pltpu.PrefetchScalarGridSpec(
            num_scalar_prefetch=0,
            grid=grid,
            in_specs=[
                pl.BlockSpec(memory_space=pltpu.MemorySpace.SMEM),  # xstart   (n_seg,)
                pl.BlockSpec(memory_space=pltpu.MemorySpace.SMEM),  # inv_dx   (n_seg,)
                pl.BlockSpec(memory_space=pltpu.MemorySpace.SMEM),  # poly coeffs, flat
                pl.BlockSpec((tr, lanes), lambda i: (i, 0)),        # x tile
            ],
            out_specs=[
                pl.BlockSpec((d, tr, lanes), lambda i: (0, i, 0)),
                pl.BlockSpec((tr, lanes), lambda i: (i, 0)),
            ],
        ),
        compiler_params=pltpu.CompilerParams(dimension_semantics=("parallel",)),
    )(xstart, inv_dx, poly_flat, x2d)

    idx = idx2d.reshape(m_pad)[:m].reshape(orig_shape)
    if soa_output:
        out = out_ld.reshape(d, m_pad)[:, :m].reshape((d,) + orig_shape)
        return out, idx
    out = jnp.transpose(out_ld, (1, 2, 0)).reshape(m_pad, d)[:m].reshape(orig_shape + (d,))
    return out, idx


def _reference(x_knots, control_points, x_eval):
    """Pure-JAX reference (same math as compositeBezierEval, torch index semantics)."""
    x_knots = jnp.asarray(x_knots, jnp.float32)
    control_points = jnp.asarray(control_points, jnp.float32)
    xstart = x_knots[:-1]
    dx = x_knots[1:] - x_knots[:-1]
    n_seg, kp1, d = control_points.shape
    k = kp1 - 1
    flat = x_eval.reshape(-1)
    idx_raw = jnp.searchsorted(xstart, flat, side='right').astype(jnp.int32) - 1
    seg = jnp.where(idx_raw < 0, n_seg - 1, idx_raw)       # torch negative-index wrap
    s = (flat - xstart[seg]) / dx[seg]
    basis = jnp.stack(
        [math.comb(k, i) * s ** i * (1.0 - s) ** (k - i) for i in range(kp1)], axis=-1)
    sel = control_points[seg]                              # (M, k+1, d)
    out = jnp.einsum('mi,mid->md', basis, sel)
    return out.reshape(x_eval.shape + (d,)), idx_raw.reshape(x_eval.shape)


if __name__ == "__main__":
    key = jax.random.PRNGKey(0)
    n_seg, k, d, m = 8, 3, 3, 5000

    # deterministic "parameters" (module __init__ takes x knots + control points)
    x_knots = jnp.linspace(0.0, float(n_seg), n_seg + 1, dtype=jnp.float32)
    k1, k2 = jax.random.split(key)
    control_points = jax.random.normal(k1, (n_seg, k + 1, d), dtype=jnp.float32)

    # ascending-knot validation (mirrors the module's ValueError check)
    assert bool(jnp.all(x_knots[1:] - x_knots[:-1] > 0)), "x values must be in ascending order"

    # evaluation points inside the curve domain
    x_eval = jax.random.uniform(k2, (m,), dtype=jnp.float32,
                                minval=float(x_knots[0]), maxval=float(x_knots[-1]))

    out, idx = composite_bezier_eval_pallas(x_knots, control_points, x_eval)
    jax.block_until_ready((out, idx))

    ref_out, ref_idx = _reference(x_knots, control_points, x_eval)
    assert out.shape == (m, d) and idx.shape == (m,)
    assert bool(jnp.all(idx == ref_idx))
    assert bool(jnp.allclose(out, ref_out, atol=5e-5, rtol=5e-5))

    print("KERNEL_OK")
</pallas_src>

<mosaic_0001>
module attributes {stable_mosaic.version = 11 : i64} {
  func.func @_cbc_kernel(%arg0: i32, %arg1: memref<8xf32, #tpu.memory_space<smem>>, %arg2: memref<8xf32, #tpu.memory_space<smem>>, %arg3: memref<96xf32, #tpu.memory_space<smem>>, %arg4: memref<24x128xf32, #tpu.memory_space<vmem>>, %arg5: memref<3x24x128xf32, #tpu.memory_space<vmem>>, %arg6: memref<24x128xi32, #tpu.memory_space<vmem>>) attributes {dimension_semantics = [#tpu.dimension_semantics<parallel>], iteration_bounds = array<i64: 2>, scalar_prefetch = 0 : i64, scratch_operands = 0 : i64, tpu.core_type = #tpu.core_type<tc>, window_params = [{transform_indices = @transform_0, window_bounds = array<i64: 8>}, {transform_indices = @transform_1, window_bounds = array<i64: 8>}, {transform_indices = @transform_2, window_bounds = array<i64: 96>}, {transform_indices = @transform_3, window_bounds = array<i64: 24, 128>}, {transform_indices = @transform_4, window_bounds = array<i64: 3, 24, 128>}, {transform_indices = @transform_5, window_bounds = array<i64: 24, 128>}]} {
    %c0 = arith.constant 0 : index
    %0 = memref.load %arg1[%c0] : memref<8xf32, #tpu.memory_space<smem>>
    %c1 = arith.constant 1 : index
    %1 = memref.load %arg1[%c1] : memref<8xf32, #tpu.memory_space<smem>>
    %c2 = arith.constant 2 : index
    %2 = memref.load %arg1[%c2] : memref<8xf32, #tpu.memory_space<smem>>
    %c3 = arith.constant 3 : index
    %3 = memref.load %arg1[%c3] : memref<8xf32, #tpu.memory_space<smem>>
    %c4 = arith.constant 4 : index
    %4 = memref.load %arg1[%c4] : memref<8xf32, #tpu.memory_space<smem>>
    %c5 = arith.constant 5 : index
    %5 = memref.load %arg1[%c5] : memref<8xf32, #tpu.memory_space<smem>>
    %c6 = arith.constant 6 : index
    %6 = memref.load %arg1[%c6] : memref<8xf32, #tpu.memory_space<smem>>
    %c7 = arith.constant 7 : index
    %7 = memref.load %arg1[%c7] : memref<8xf32, #tpu.memory_space<smem>>
    %c0_0 = arith.constant 0 : index
    %8 = memref.load %arg2[%c0_0] : memref<8xf32, #tpu.memory_space<smem>>
    %c1_1 = arith.constant 1 : index
    %9 = memref.load %arg2[%c1_1] : memref<8xf32, #tpu.memory_space<smem>>
    %c2_2 = arith.constant 2 : index
    %10 = memref.load %arg2[%c2_2] : memref<8xf32, #tpu.memory_space<smem>>
    %c3_3 = arith.constant 3 : index
    %11 = memref.load %arg2[%c3_3] : memref<8xf32, #tpu.memory_space<smem>>
    %c4_4 = arith.constant 4 : index
    %12 = memref.load %arg2[%c4_4] : memref<8xf32, #tpu.memory_space<smem>>
    %c5_5 = arith.constant 5 : index
    %13 = memref.load %arg2[%c5_5] : memref<8xf32, #tpu.memory_space<smem>>
    %c6_6 = arith.constant 6 : index
    %14 = memref.load %arg2[%c6_6] : memref<8xf32, #tpu.memory_space<smem>>
    %c7_7 = arith.constant 7 : index
    %15 = memref.load %arg2[%c7_7] : memref<8xf32, #tpu.memory_space<smem>>
    %c0_8 = arith.constant 0 : index
    %16 = memref.load %arg3[%c0_8] : memref<96xf32, #tpu.memory_space<smem>>
    %c12 = arith.constant 12 : index
    %17 = memref.load %arg3[%c12] : memref<96xf32, #tpu.memory_space<smem>>
    %c24 = arith.constant 24 : index
    %18 = memref.load %arg3[%c24] : memref<96xf32, #tpu.memory_space<smem>>
    %c36 = arith.constant 36 : index
    %19 = memref.load %arg3[%c36] : memref<96xf32, #tpu.memory_space<smem>>
    %c48 = arith.constant 48 : index
    %20 = memref.load %arg3[%c48] : memref<96xf32, #tpu.memory_space<smem>>
    %c60 = arith.constant 60 : index
    %21 = memref.load %arg3[%c60] : memref<96xf32, #tpu.memory_space<smem>>
    %c72 = arith.constant 72 : index
    %22 = memref.load %arg3[%c72] : memref<96xf32, #tpu.memory_space<smem>>
    %c84 = arith.constant 84 : index
    %23 = memref.load %arg3[%c84] : memref<96xf32, #tpu.memory_space<smem>>
    %c3_9 = arith.constant 3 : index
    %24 = memref.load %arg3[%c3_9] : memref<96xf32, #tpu.memory_space<smem>>
    %c15 = arith.constant 15 : index
    %25 = memref.load %arg3[%c15] : memref<96xf32, #tpu.memory_space<smem>>
    %c27 = arith.constant 27 : index
    %26 = memref.load %arg3[%c27] : memref<96xf32, #tpu.memory_space<smem>>
    %c39 = arith.constant 39 : index
    %27 = memref.load %arg3[%c39] : memref<96xf32, #tpu.memory_space<smem>>
    %c51 = arith.constant 51 : index
    %28 = memref.load %arg3[%c51] : memref<96xf32, #tpu.memory_space<smem>>
    %c63 = arith.constant 63 : index
    %29 = memref.load %arg3[%c63] : memref<96xf32, #tpu.memory_space<smem>>
    %c75 = arith.constant 75 : index
    %30 = memref.load %arg3[%c75] : memref<96xf32, #tpu.memory_space<smem>>
    %c87 = arith.constant 87 : index
    %31 = memref.load %arg3[%c87] : memref<96xf32, #tpu.memory_space<smem>>
    %c6_10 = arith.constant 6 : index
    %32 = memref.load %arg3[%c6_10] : memref<96xf32, #tpu.memory_space<smem>>
    %c18 = arith.constant 18 : index
    %33 = memref.load %arg3[%c18] : memref<96xf32, #tpu.memory_space<smem>>
    %c30 = arith.constant 30 : index
    %34 = memref.load %arg3[%c30] : memref<96xf32, #tpu.memory_space<smem>>
    %c42 = arith.constant 42 : index
    %35 = memref.load %arg3[%c42] : memref<96xf32, #tpu.memory_space<smem>>
    %c54 = arith.constant 54 : index
    %36 = memref.load %arg3[%c54] : memref<96xf32, #tpu.memory_space<smem>>
    %c66 = arith.constant 66 : index
    %37 = memref.load %arg3[%c66] : memref<96xf32, #tpu.memory_space<smem>>
    %c78 = arith.constant 78 : index
    %38 = memref.load %arg3[%c78] : memref<96xf32, #tpu.memory_space<smem>>
    %c90 = arith.constant 90 : index
    %39 = memref.load %arg3[%c90] : memref<96xf32, #tpu.memory_space<smem>>
    %c9 = arith.constant 9 : index
    %40 = memref.load %arg3[%c9] : memref<96xf32, #tpu.memory_space<smem>>
    %c21 = arith.constant 21 : index
    %41 = memref.load %arg3[%c21] : memref<96xf32, #tpu.memory_space<smem>>
    %c33 = arith.constant 33 : index
    %42 = memref.load %arg3[%c33] : memref<96xf32, #tpu.memory_space<smem>>
    %c45 = arith.constant 45 : index
    %43 = memref.load %arg3[%c45] : memref<96xf32, #tpu.memory_space<smem>>
    %c57 = arith.constant 57 : index
    %44 = memref.load %arg3[%c57] : memref<96xf32, #tpu.memory_space<smem>>
    %c69 = arith.constant 69 : index
    %45 = memref.load %arg3[%c69] : memref<96xf32, #tpu.memory_space<smem>>
    %c81 = arith.constant 81 : index
    %46 = memref.load %arg3[%c81] : memref<96xf32, #tpu.memory_space<smem>>
    %c93 = arith.constant 93 : index
    %47 = memref.load %arg3[%c93] : memref<96xf32, #tpu.memory_space<smem>>
    %c1_11 = arith.constant 1 : index
    %48 = memref.load %arg3[%c1_11] : memref<96xf32, #tpu.memory_space<smem>>
    %c13 = arith.constant 13 : index
    %49 = memref.load %arg3[%c13] : memref<96xf32, #tpu.memory_space<smem>>
    %c25 = arith.constant 25 : index
    %50 = memref.load %arg3[%c25] : memref<96xf32, #tpu.memory_space<smem>>
    %c37 = arith.constant 37 : index
    %51 = memref.load %arg3[%c37] : memref<96xf32, #tpu.memory_space<smem>>
    %c49 = arith.constant 49 : index
    %52 = memref.load %arg3[%c49] : memref<96xf32, #tpu.memory_space<smem>>
    %c61 = arith.constant 61 : index
    %53 = memref.load %arg3[%c61] : memref<96xf32, #tpu.memory_space<smem>>
    %c73 = arith.constant 73 : index
    %54 = memref.load %arg3[%c73] : memref<96xf32, #tpu.memory_space<smem>>
    %c85 = arith.constant 85 : index
    %55 = memref.load %arg3[%c85] : memref<96xf32, #tpu.memory_space<smem>>
    %c4_12 = arith.constant 4 : index
    %56 = memref.load %arg3[%c4_12] : memref<96xf32, #tpu.memory_space<smem>>
    %c16 = arith.constant 16 : index
    %57 = memref.load %arg3[%c16] : memref<96xf32, #tpu.memory_space<smem>>
    %c28 = arith.constant 28 : index
    %58 = memref.load %arg3[%c28] : memref<96xf32, #tpu.memory_space<smem>>
    %c40 = arith.constant 40 : index
    %59 = memref.load %arg3[%c40] : memref<96xf32, #tpu.memory_space<smem>>
    %c52 = arith.constant 52 : index
    %60 = memref.load %arg3[%c52] : memref<96xf32, #tpu.memory_space<smem>>
    %c64 = arith.constant 64 : index
    %61 = memref.load %arg3[%c64] : memref<96xf32, #tpu.memory_space<smem>>
    %c76 = arith.constant 76 : index
    %62 = memref.load %arg3[%c76] : memref<96xf32, #tpu.memory_space<smem>>
    %c88 = arith.constant 88 : index
    %63 = memref.load %arg3[%c88] : memref<96xf32, #tpu.memory_space<smem>>
    %c7_13 = arith.constant 7 : index
    %64 = memref.load %arg3[%c7_13] : memref<96xf32, #tpu.memory_space<smem>>
    %c19 = arith.constant 19 : index
    %65 = memref.load %arg3[%c19] : memref<96xf32, #tpu.memory_space<smem>>
    %c31 = arith.constant 31 : index
    %66 = memref.load %arg3[%c31] : memref<96xf32, #tpu.memory_space<smem>>
    %c43 = arith.constant 43 : index
    %67 = memref.load %arg3[%c43] : memref<96xf32, #tpu.memory_space<smem>>
    %c55 = arith.constant 55 : index
    %68 = memref.load %arg3[%c55] : memref<96xf32, #tpu.memory_space<smem>>
    %c67 = arith.constant 67 : index
    %69 = memref.load %arg3[%c67] : memref<96xf32, #tpu.memory_space<smem>>
    %c79 = arith.constant 79 : index
    %70 = memref.load %arg3[%c79] : memref<96xf32, #tpu.memory_space<smem>>
    %c91 = arith.constant 91 : index
    %71 = memref.load %arg3[%c91] : memref<96xf32, #tpu.memory_space<smem>>
    %c10 = arith.constant 10 : index
    %72 = memref.load %arg3[%c10] : memref<96xf32, #tpu.memory_space<smem>>
    %c22 = arith.constant 22 : index
    %73 = memref.load %arg3[%c22] : memref<96xf32, #tpu.memory_space<smem>>
    %c34 = arith.constant 34 : index
    %74 = memref.load %arg3[%c34] : memref<96xf32, #tpu.memory_space<smem>>
    %c46 = arith.constant 46 : index
    %75 = memref.load %arg3[%c46] : memref<96xf32, #tpu.memory_space<smem>>
    %c58 = arith.constant 58 : index
    %76 = memref.load %arg3[%c58] : memref<96xf32, #tpu.memory_space<smem>>
    %c70 = arith.constant 70 : index
    %77 = memref.load %arg3[%c70] : memref<96xf32, #tpu.memory_space<smem>>
    %c82 = arith.constant 82 : index
    %78 = memref.load %arg3[%c82] : memref<96xf32, #tpu.memory_space<smem>>
    %c94 = arith.constant 94 : index
    %79 = memref.load %arg3[%c94] : memref<96xf32, #tpu.memory_space<smem>>
    %c2_14 = arith.constant 2 : index
    %80 = memref.load %arg3[%c2_14] : memref<96xf32, #tpu.memory_space<smem>>
    %c14 = arith.constant 14 : index
    %81 = memref.load %arg3[%c14] : memref<96xf32, #tpu.memory_space<smem>>
    %c26 = arith.constant 26 : index
    %82 = memref.load %arg3[%c26] : memref<96xf32, #tpu.memory_space<smem>>
    %c38 = arith.constant 38 : index
    %83 = memref.load %arg3[%c38] : memref<96xf32, #tpu.memory_space<smem>>
    %c50 = arith.constant 50 : index
    %84 = memref.load %arg3[%c50] : memref<96xf32, #tpu.memory_space<smem>>
    %c62 = arith.constant 62 : index
    %85 = memref.load %arg3[%c62] : memref<96xf32, #tpu.memory_space<smem>>
    %c74 = arith.constant 74 : index
    %86 = memref.load %arg3[%c74] : memref<96xf32, #tpu.memory_space<smem>>
    %c86 = arith.constant 86 : index
    %87 = memref.load %arg3[%c86] : memref<96xf32, #tpu.memory_space<smem>>
    %c5_15 = arith.constant 5 : index
    %88 = memref.load %arg3[%c5_15] : memref<96xf32, #tpu.memory_space<smem>>
    %c17 = arith.constant 17 : index
    %89 = memref.load %arg3[%c17] : memref<96xf32, #tpu.memory_space<smem>>
    %c29 = arith.constant 29 : index
    %90 = memref.load %arg3[%c29] : memref<96xf32, #tpu.memory_space<smem>>
    %c41 = arith.constant 41 : index
    %91 = memref.load %arg3[%c41] : memref<96xf32, #tpu.memory_space<smem>>
    %c53 = arith.constant 53 : index
    %92 = memref.load %arg3[%c53] : memref<96xf32, #tpu.memory_space<smem>>
    %c65 = arith.constant 65 : index
    %93 = memref.load %arg3[%c65] : memref<96xf32, #tpu.memory_space<smem>>
    %c77 = arith.constant 77 : index
    %94 = memref.load %arg3[%c77] : memref<96xf32, #tpu.memory_space<smem>>
    %c89 = arith.constant 89 : index
    %95 = memref.load %arg3[%c89] : memref<96xf32, #tpu.memory_space<smem>>
    %c8 = arith.constant 8 : index
    %96 = memref.load %arg3[%c8] : memref<96xf32, #tpu.memory_space<smem>>
    %c20 = arith.constant 20 : index
    %97 = memref.load %arg3[%c20] : memref<96xf32, #tpu.memory_space<smem>>
    %c32 = arith.constant 32 : index
    %98 = memref.load %arg3[%c32] : memref<96xf32, #tpu.memory_space<smem>>
    %c44 = arith.constant 44 : index
    %99 = memref.load %arg3[%c44] : memref<96xf32, #tpu.memory_space<smem>>
    %c56 = arith.constant 56 : index
    %100 = memref.load %arg3[%c56] : memref<96xf32, #tpu.memory_space<smem>>
    %c68 = arith.constant 68 : index
    %101 = memref.load %arg3[%c68] : memref<96xf32, #tpu.memory_space<smem>>
    %c80 = arith.constant 80 : index
    %102 = memref.load %arg3[%c80] : memref<96xf32, #tpu.memory_space<smem>>
    %c92 = arith.constant 92 : index
    %103 = memref.load %arg3[%c92] : memref<96xf32, #tpu.memory_space<smem>>
    %c11 = arith.constant 11 : index
    %104 = memref.load %arg3[%c11] : memref<96xf32, #tpu.memory_space<smem>>
    %c23 = arith.constant 23 : index
    %105 = memref.load %arg3[%c23] : memref<96xf32, #tpu.memory_space<smem>>
    %c35 = arith.constant 35 : index
    %106 = memref.load %arg3[%c35] : memref<96xf32, #tpu.memory_space<smem>>
    %c47 = arith.constant 47 : index
    %107 = memref.load %arg3[%c47] : memref<96xf32, #tpu.memory_space<smem>>
    %c59 = arith.constant 59 : index
    %108 = memref.load %arg3[%c59] : memref<96xf32, #tpu.memory_space<smem>>
    %c71 = arith.constant 71 : index
    %109 = memref.load %arg3[%c71] : memref<96xf32, #tpu.memory_space<smem>>
    %c83 = arith.constant 83 : index
    %110 = memref.load %arg3[%c83] : memref<96xf32, #tpu.memory_space<smem>>
    %c95 = arith.constant 95 : index
    %111 = memref.load %arg3[%c95] : memref<96xf32, #tpu.memory_space<smem>>
    %c0_i32 = arith.constant 0 : i32
    %c3_i32 = arith.constant 3 : i32
    %112 = arith.addi %c0_i32, %c3_i32 : i32
    %c1_i32 = arith.constant 1 : i32
    scf.for %arg7 = %c0_i32 to %112 step %c1_i32  : i32 {
      %c8_i32 = arith.constant 8 : i32
      %113 = arith.muli %arg7, %c8_i32 : i32
      %114 = tpu.assume_multiple %113, 8 : i32
      %115 = arith.index_cast %114 : i32 to index
      %c0_17 = arith.constant 0 : index
      %116 = vector.load %arg4[%115, %c0_17] : memref<24x128xf32, #tpu.memory_space<vmem>>, vector<8x128xf32>
      %117 = vector.broadcast %0 : f32 to vector<8x128xf32>
      %118 = arith.cmpf oge, %116, %117 : vector<8x128xf32>
      %119 = vector.broadcast %1 : f32 to vector<8x128xf32>
      %120 = arith.cmpf oge, %116, %119 : vector<8x128xf32>
      %121 = vector.broadcast %2 : f32 to vector<8x128xf32>
      %122 = arith.cmpf oge, %116, %121 : vector<8x128xf32>
      %123 = vector.broadcast %3 : f32 to vector<8x128xf32>
      %124 = arith.cmpf oge, %116, %123 : vector<8x128xf32>
      %125 = vector.broadcast %4 : f32 to vector<8x128xf32>
      %126 = arith.cmpf oge, %116, %125 : vector<8x128xf32>
      %127 = vector.broadcast %5 : f32 to vector<8x128xf32>
      %128 = arith.cmpf oge, %116, %127 : vector<8x128xf32>
      %129 = vector.broadcast %6 : f32 to vector<8x128xf32>
      %130 = arith.cmpf oge, %116, %129 : vector<8x128xf32>
      %131 = vector.broadcast %7 : f32 to vector<8x128xf32>
      %132 = arith.cmpf oge, %116, %131 : vector<8x128xf32>
      %133 = arith.extui %118 : vector<8x128xi1> to vector<8x128xi32>
      %134 = arith.extui %120 : vector<8x128xi1> to vector<8x128xi32>
      %135 = arith.addi %133, %134 : vector<8x128xi32>
      %136 = arith.extui %122 : vector<8x128xi1> to vector<8x128xi32>
      %137 = arith.addi %135, %136 : vector<8x128xi32>
      %138 = arith.extui %124 : vector<8x128xi1> to vector<8x128xi32>
      %139 = arith.addi %137, %138 : vector<8x128xi32>
      %140 = arith.extui %126 : vector<8x128xi1> to vector<8x128xi32>
      %141 = arith.addi %139, %140 : vector<8x128xi32>
      %142 = arith.extui %128 : vector<8x128xi1> to vector<8x128xi32>
      %143 = arith.addi %141, %142 : vector<8x128xi32>
      %144 = arith.extui %130 : vector<8x128xi1> to vector<8x128xi32>
      %145 = arith.addi %143, %144 : vector<8x128xi32>
      %146 = arith.extui %132 : vector<8x128xi1> to vector<8x128xi32>
      %147 = arith.addi %145, %146 : vector<8x128xi32>
      %c1_i32_18 = arith.constant 1 : i32
      %148 = vector.broadcast %c1_i32_18 : i32 to vector<8x128xi32>
      %149 = arith.subi %147, %148 : vector<8x128xi32>
      %150 = arith.index_cast %114 : i32 to index
      %c0_19 = arith.constant 0 : index
      %151 = vector.load %arg6[%150, %c0_19] : memref<24x128xi32, #tpu.memory_space<vmem>>, vector<8x128xi32>
      tpu.vector_store %arg6[%150, %c0_19], %149 {strides = array<i32>} : memref<24x128xi32, #tpu.memory_space<vmem>>, vector<8x128xi32>,
      %152 = vector.broadcast %0 : f32 to vector<8x128xf32>
      %153 = vector.broadcast %7 : f32 to vector<8x128xf32>
      %154 = arith.select %118, %152, %153 : vector<8x128xi1>, vector<8x128xf32>
      %155 = vector.broadcast %1 : f32 to vector<8x128xf32>
      %156 = arith.select %120, %155, %154 : vector<8x128xi1>, vector<8x128xf32>
      %157 = vector.broadcast %2 : f32 to vector<8x128xf32>
      %158 = arith.select %122, %157, %156 : vector<8x128xi1>, vector<8x128xf32>
      %159 = vector.broadcast %3 : f32 to vector<8x128xf32>
      %160 = arith.select %124, %159, %158 : vector<8x128xi1>, vector<8x128xf32>
      %161 = vector.broadcast %4 : f32 to vector<8x128xf32>
      %162 = arith.select %126, %161, %160 : vector<8x128xi1>, vector<8x128xf32>
      %163 = vector.broadcast %5 : f32 to vector<8x128xf32>
      %164 = arith.select %128, %163, %162 : vector<8x128xi1>, vector<8x128xf32>
      %165 = vector.broadcast %6 : f32 to vector<8x128xf32>
      %166 = arith.select %130, %165, %164 : vector<8x128xi1>, vector<8x128xf32>
      %167 = vector.broadcast %7 : f32 to vector<8x128xf32>
      %168 = arith.select %132, %167, %166 : vector<8x128xi1>, vector<8x128xf32>
      %169 = arith.subf %116, %168 : vector<8x128xf32>
      %170 = vector.broadcast %8 : f32 to vector<8x128xf32>
      %171 = vector.broadcast %15 : f32 to vector<8x128xf32>
      %172 = arith.select %118, %170, %171 : vector<8x128xi1>, vector<8x128xf32>
      %173 = vector.broadcast %9 : f32 to vector<8x128xf32>
      %174 = arith.select %120, %173, %172 : vector<8x128xi1>, vector<8x128xf32>
      %175 = vector.broadcast %10 : f32 to vector<8x128xf32>
      %176 = arith.select %122, %175, %174 : vector<8x128xi1>, vector<8x128xf32>
      %177 = vector.broadcast %11 : f32 to vector<8x128xf32>
      %178 = arith.select %124, %177, %176 : vector<8x128xi1>, vector<8x128xf32>
      %179 = vector.broadcast %12 : f32 to vector<8x128xf32>
      %180 = arith.select %126, %179, %178 : vector<8x128xi1>, vector<8x128xf32>
      %181 = vector.broadcast %13 : f32 to vector<8x128xf32>
      %182 = arith.select %128, %181, %180 : vector<8x128xi1>, vector<8x128xf32>
      %183 = vector.broadcast %14 : f32 to vector<8x128xf32>
      %184 = arith.select %130, %183, %182 : vector<8x128xi1>, vector<8x128xf32>
      %185 = vector.broadcast %15 : f32 to vector<8x128xf32>
      %186 = arith.select %132, %185, %184 : vector<8x128xi1>, vector<8x128xf32>
      %187 = arith.mulf %169, %186 : vector<8x128xf32>
      %188 = vector.broadcast %40 : f32 to vector<8x128xf32>
      %189 = vector.broadcast %47 : f32 to vector<8x128xf32>
      %190 = arith.select %118, %188, %189 : vector<8x128xi1>, vector<8x128xf32>
      %191 = vector.broadcast %41 : f32 to vector<8x128xf32>
      %192 = arith.select %120, %191, %190 : vector<8x128xi1>, vector<8x128xf32>
      %193 = vector.broadcast %42 : f32 to vector<8x128xf32>
      %194 = arith.select %122, %193, %192 : vector<8x128xi1>, vector<8x128xf32>
      %195 = vector.broadcast %43 : f32 to vector<8x128xf32>
      %196 = arith.select %124, %195, %194 : vector<8x128xi1>, vector<8x128xf32>
      %197 = vector.broadcast %44 : f32 to vector<8x128xf32>
      %198 = arith.select %126, %197, %196 : vector<8x128xi1>, vector<8x128xf32>
      %199 = vector.broadcast %45 : f32 to vector<8x128xf32>
      %200 = arith.select %128, %199, %198 : vector<8x128xi1>, vector<8x128xf32>
      %201 = vector.broadcast %46 : f32 to vector<8x128xf32>
      %202 = arith.select %130, %201, %200 : vector<8x128xi1>, vector<8x128xf32>
      %203 = vector.broadcast %47 : f32 to vector<8x128xf32>
      %204 = arith.select %132, %203, %202 : vector<8x128xi1>, vector<8x128xf32>
      %205 = arith.mulf %204, %187 : vector<8x128xf32>
      %206 = vector.broadcast %32 : f32 to vector<8x128xf32>
      %207 = vector.broadcast %39 : f32 to vector<8x128xf32>
      %208 = arith.select %118, %206, %207 : vector<8x128xi1>, vector<8x128xf32>
      %209 = vector.broadcast %33 : f32 to vector<8x128xf32>
      %210 = arith.select %120, %209, %208 : vector<8x128xi1>, vector<8x128xf32>
      %211 = vector.broadcast %34 : f32 to vector<8x128xf32>
      %212 = arith.select %122, %211, %210 : vector<8x128xi1>, vector<8x128xf32>
      %213 = vector.broadcast %35 : f32 to vector<8x128xf32>
      %214 = arith.select %124, %213, %212 : vector<8x128xi1>, vector<8x128xf32>
      %215 = vector.broadcast %36 : f32 to vector<8x128xf32>
      %216 = arith.select %126, %215, %214 : vector<8x128xi1>, vector<8x128xf32>
      %217 = vector.broadcast %37 : f32 to vector<8x128xf32>
      %218 = arith.select %128, %217, %216 : vector<8x128xi1>, vector<8x128xf32>
      %219 = vector.broadcast %38 : f32 to vector<8x128xf32>
      %220 = arith.select %130, %219, %218 : vector<8x128xi1>, vector<8x128xf32>
      %221 = vector.broadcast %39 : f32 to vector<8x128xf32>
      %222 = arith.select %132, %221, %220 : vector<8x128xi1>, vector<8x128xf32>
      %223 = arith.addf %205, %222 : vector<8x128xf32>
      %224 = arith.mulf %223, %187 : vector<8x128xf32>
      %225 = vector.broadcast %24 : f32 to vector<8x128xf32>
      %226 = vector.broadcast %31 : f32 to vector<8x128xf32>
      %227 = arith.select %118, %225, %226 : vector<8x128xi1>, vector<8x128xf32>
      %228 = vector.broadcast %25 : f32 to vector<8x128xf32>
      %229 = arith.select %120, %228, %227 : vector<8x128xi1>, vector<8x128xf32>
      %230 = vector.broadcast %26 : f32 to vector<8x128xf32>
      %231 = arith.select %122, %230, %229 : vector<8x128xi1>, vector<8x128xf32>
      %232 = vector.broadcast %27 : f32 to vector<8x128xf32>
      %233 = arith.select %124, %232, %231 : vector<8x128xi1>, vector<8x128xf32>
      %234 = vector.broadcast %28 : f32 to vector<8x128xf32>
      %235 = arith.select %126, %234, %233 : vector<8x128xi1>, vector<8x128xf32>
      %236 = vector.broadcast %29 : f32 to vector<8x128xf32>
      %237 = arith.select %128, %236, %235 : vector<8x128xi1>, vector<8x128xf32>
      %238 = vector.broadcast %30 : f32 to vector<8x128xf32>
      %239 = arith.select %130, %238, %237 : vector<8x128xi1>, vector<8x128xf32>
      %240 = vector.broadcast %31 : f32 to vector<8x128xf32>
      %241 = arith.select %132, %240, %239 : vector<8x128xi1>, vector<8x128xf32>
      %242 = arith.addf %224, %241 : vector<8x128xf32>
      %243 = arith.mulf %242, %187 : vector<8x128xf32>
      %244 = vector.broadcast %16 : f32 to vector<8x128xf32>
      %245 = vector.broadcast %23 : f32 to vector<8x128xf32>
      %246 = arith.select %118, %244, %245 : vector<8x128xi1>, vector<8x128xf32>
      %247 = vector.broadcast %17 : f32 to vector<8x128xf32>
      %248 = arith.select %120, %247, %246 : vector<8x128xi1>, vector<8x128xf32>
      %249 = vector.broadcast %18 : f32 to vector<8x128xf32>
      %250 = arith.select %122, %249, %248 : vector<8x128xi1>, vector<8x128xf32>
      %251 = vector.broadcast %19 : f32 to vector<8x128xf32>
      %252 = arith.select %124, %251, %250 : vector<8x128xi1>, vector<8x128xf32>
      %253 = vector.broadcast %20 : f32 to vector<8x128xf32>
      %254 = arith.select %126, %253, %252 : vector<8x128xi1>, vector<8x128xf32>
      %255 = vector.broadcast %21 : f32 to vector<8x128xf32>
      %256 = arith.select %128, %255, %254 : vector<8x128xi1>, vector<8x128xf32>
      %257 = vector.broadcast %22 : f32 to vector<8x128xf32>
      %258 = arith.select %130, %257, %256 : vector<8x128xi1>, vector<8x128xf32>
      %259 = vector.broadcast %23 : f32 to vector<8x128xf32>
      %260 = arith.select %132, %259, %258 : vector<8x128xi1>, vector<8x128xf32>
      %261 = arith.addf %243, %260 : vector<8x128xf32>
      %c0_20 = arith.constant 0 : index
      %262 = arith.index_cast %114 : i32 to index
      %c0_21 = arith.constant 0 : index
      %263 = vector.load %arg5[%c0_20, %262, %c0_21] : memref<3x24x128xf32, #tpu.memory_space<vmem>>, vector<1x8x128xf32>
      %264 = vector.shape_cast %263 : vector<1x8x128xf32> to vector<8x128xf32>
      %265 = vector.shape_cast %261 : vector<8x128xf32> to vector<1x8x128xf32>
      tpu.vector_store %arg5[%c0_20, %262, %c0_21], %265 {strides = array<i32>} : memref<3x24x128xf32, #tpu.memory_space<vmem>>, vector<1x8x128xf32>,
      %266 = vector.broadcast %72 : f32 to vector<8x128xf32>
      %267 = vector.broadcast %79 : f32 to vector<8x128xf32>
      %268 = arith.select %118, %266, %267 : vector<8x128xi1>, vector<8x128xf32>
      %269 = vector.broadcast %73 : f32 to vector<8x128xf32>
      %270 = arith.select %120, %269, %268 : vector<8x128xi1>, vector<8x128xf32>
      %271 = vector.broadcast %74 : f32 to vector<8x128xf32>
      %272 = arith.select %122, %271, %270 : vector<8x128xi1>, vector<8x128xf32>
      %273 = vector.broadcast %75 : f32 to vector<8x128xf32>
      %274 = arith.select %124, %273, %272 : vector<8x128xi1>, vector<8x128xf32>
      %275 = vector.broadcast %76 : f32 to vector<8x128xf32>
      %276 = arith.select %126, %275, %274 : vector<8x128xi1>, vector<8x128xf32>
      %277 = vector.broadcast %77 : f32 to vector<8x128xf32>
      %278 = arith.select %128, %277, %276 : vector<8x128xi1>, vector<8x128xf32>
      %279 = vector.broadcast %78 : f32 to vector<8x128xf32>
      %280 = arith.select %130, %279, %278 : vector<8x128xi1>, vector<8x128xf32>
      %281 = vector.broadcast %79 : f32 to vector<8x128xf32>
      %282 = arith.select %132, %281, %280 : vector<8x128xi1>, vector<8x128xf32>
      %283 = arith.mulf %282, %187 : vector<8x128xf32>
      %284 = vector.broadcast %64 : f32 to vector<8x128xf32>
      %285 = vector.broadcast %71 : f32 to vector<8x128xf32>
      %286 = arith.select %118, %284, %285 : vector<8x128xi1>, vector<8x128xf32>
      %287 = vector.broadcast %65 : f32 to vector<8x128xf32>
      %288 = arith.select %120, %287, %286 : vector<8x128xi1>, vector<8x128xf32>
      %289 = vector.broadcast %66 : f32 to vector<8x128xf32>
      %290 = arith.select %122, %289, %288 : vector<8x128xi1>, vector<8x128xf32>
      %291 = vector.broadcast %67 : f32 to vector<8x128xf32>
      %292 = arith.select %124, %291, %290 : vector<8x128xi1>, vector<8x128xf32>
      %293 = vector.broadcast %68 : f32 to vector<8x128xf32>
      %294 = arith.select %126, %293, %292 : vector<8x128xi1>, vector<8x128xf32>
      %295 = vector.broadcast %69 : f32 to vector<8x128xf32>
      %296 = arith.select %128, %295, %294 : vector<8x128xi1>, vector<8x128xf32>
      %297 = vector.broadcast %70 : f32 to vector<8x128xf32>
      %298 = arith.select %130, %297, %296 : vector<8x128xi1>, vector<8x128xf32>
      %299 = vector.broadcast %71 : f32 to vector<8x128xf32>
      %300 = arith.select %132, %299, %298 : vector<8x128xi1>, vector<8x128xf32>
      %301 = arith.addf %283, %300 : vector<8x128xf32>
      %302 = arith.mulf %301, %187 : vector<8x128xf32>
      %303 = vector.broadcast %56 : f32 to vector<8x128xf32>
      %304 = vector.broadcast %63 : f32 to vector<8x128xf32>
      %305 = arith.select %118, %303, %304 : vector<8x128xi1>, vector<8x128xf32>
      %306 = vector.broadcast %57 : f32 to vector<8x128xf32>
      %307 = arith.select %120, %306, %305 : vector<8x128xi1>, vector<8x128xf32>
      %308 = vector.broadcast %58 : f32 to vector<8x128xf32>
      %309 = arith.select %122, %308, %307 : vector<8x128xi1>, vector<8x128xf32>
      %310 = vector.broadcast %59 : f32 to vector<8x128xf32>
      %311 = arith.select %124, %310, %309 : vector<8x128xi1>, vector<8x128xf32>
      %312 = vector.broadcast %60 : f32 to vector<8x128xf32>
      %313 = arith.select %126, %312, %311 : vector<8x128xi1>, vector<8x128xf32>
      %314 = vector.broadcast %61 : f32 to vector<8x128xf32>
      %315 = arith.select %128, %314, %313 : vector<8x128xi1>, vector<8x128xf32>
      %316 = vector.broadcast %62 : f32 to vector<8x128xf32>
      %317 = arith.select %130, %316, %315 : vector<8x128xi1>, vector<8x128xf32>
      %318 = vector.broadcast %63 : f32 to vector<8x128xf32>
      %319 = arith.select %132, %318, %317 : vector<8x128xi1>, vector<8x128xf32>
      %320 = arith.addf %302, %319 : vector<8x128xf32>
      %321 = arith.mulf %320, %187 : vector<8x128xf32>
      %322 = vector.broadcast %48 : f32 to vector<8x128xf32>
      %323 = vector.broadcast %55 : f32 to vector<8x128xf32>
      %324 = arith.select %118, %322, %323 : vector<8x128xi1>, vector<8x128xf32>
      %325 = vector.broadcast %49 : f32 to vector<8x128xf32>
      %326 = arith.select %120, %325, %324 : vector<8x128xi1>, vector<8x128xf32>
      %327 = vector.broadcast %50 : f32 to vector<8x128xf32>
      %328 = arith.select %122, %327, %326 : vector<8x128xi1>, vector<8x128xf32>
      %329 = vector.broadcast %51 : f32 to vector<8x128xf32>
      %330 = arith.select %124, %329, %328 : vector<8x128xi1>, vector<8x128xf32>
      %331 = vector.broadcast %52 : f32 to vector<8x128xf32>
      %332 = arith.select %126, %331, %330 : vector<8x128xi1>, vector<8x128xf32>
      %333 = vector.broadcast %53 : f32 to vector<8x128xf32>
      %334 = arith.select %128, %333, %332 : vector<8x128xi1>, vector<8x128xf32>
      %335 = vector.broadcast %54 : f32 to vector<8x128xf32>
      %336 = arith.select %130, %335, %334 : vector<8x128xi1>, vector<8x128xf32>
      %337 = vector.broadcast %55 : f32 to vector<8x128xf32>
      %338 = arith.select %132, %337, %336 : vector<8x128xi1>, vector<8x128xf32>
      %339 = arith.addf %321, %338 : vector<8x128xf32>
      %c1_22 = arith.constant 1 : index
      %340 = arith.index_cast %114 : i32 to index
      %c0_23 = arith.constant 0 : index
      %341 = vector.load %arg5[%c1_22, %340, %c0_23] : memref<3x24x128xf32, #tpu.memory_space<vmem>>, vector<1x8x128xf32>
      %342 = vector.shape_cast %341 : vector<1x8x128xf32> to vector<8x128xf32>
      %343 = vector.shape_cast %339 : vector<8x128xf32> to vector<1x8x128xf32>
      tpu.vector_store %arg5[%c1_22, %340, %c0_23], %343 {strides = array<i32>} : memref<3x24x128xf32, #tpu.memory_space<vmem>>, vector<1x8x128xf32>,
      %344 = vector.broadcast %104 : f32 to vector<8x128xf32>
      %345 = vector.broadcast %111 : f32 to vector<8x128xf32>
      %346 = arith.select %118, %344, %345 : vector<8x128xi1>, vector<8x128xf32>
      %347 = vector.broadcast %105 : f32 to vector<8x128xf32>
      %348 = arith.select %120, %347, %346 : vector<8x128xi1>, vector<8x128xf32>
      %349 = vector.broadcast %106 : f32 to vector<8x128xf32>
      %350 = arith.select %122, %349, %348 : vector<8x128xi1>, vector<8x128xf32>
      %351 = vector.broadcast %107 : f32 to vector<8x128xf32>
      %352 = arith.select %124, %351, %350 : vector<8x128xi1>, vector<8x128xf32>
      %353 = vector.broadcast %108 : f32 to vector<8x128xf32>
      %354 = arith.select %126, %353, %352 : vector<8x128xi1>, vector<8x128xf32>
      %355 = vector.broadcast %109 : f32 to vector<8x128xf32>
      %356 = arith.select %128, %355, %354 : vector<8x128xi1>, vector<8x128xf32>
      %357 = vector.broadcast %110 : f32 to vector<8x128xf32>
      %358 = arith.select %130, %357, %356 : vector<8x128xi1>, vector<8x128xf32>
      %359 = vector.broadcast %111 : f32 to vector<8x128xf32>
      %360 = arith.select %132, %359, %358 : vector<8x128xi1>, vector<8x128xf32>
      %361 = arith.mulf %360, %187 : vector<8x128xf32>
      %362 = vector.broadcast %96 : f32 to vector<8x128xf32>
      %363 = vector.broadcast %103 : f32 to vector<8x128xf32>
      %364 = arith.select %118, %362, %363 : vector<8x128xi1>, vector<8x128xf32>
      %365 = vector.broadcast %97 : f32 to vector<8x128xf32>
      %366 = arith.select %120, %365, %364 : vector<8x128xi1>, vector<8x128xf32>
      %367 = vector.broadcast %98 : f32 to vector<8x128xf32>
      %368 = arith.select %122, %367, %366 : vector<8x128xi1>, vector<8x128xf32>
      %369 = vector.broadcast %99 : f32 to vector<8x128xf32>
      %370 = arith.select %124, %369, %368 : vector<8x128xi1>, vector<8x128xf32>
      %371 = vector.broadcast %100 : f32 to vector<8x128xf32>
      %372 = arith.select %126, %371, %370 : vector<8x128xi1>, vector<8x128xf32>
      %373 = vector.broadcast %101 : f32 to vector<8x128xf32>
      %374 = arith.select %128, %373, %372 : vector<8x128xi1>, vector<8x128xf32>
      %375 = vector.broadcast %102 : f32 to vector<8x128xf32>
      %376 = arith.select %130, %375, %374 : vector<8x128xi1>, vector<8x128xf32>
      %377 = vector.broadcast %103 : f32 to vector<8x128xf32>
      %378 = arith.select %132, %377, %376 : vector<8x128xi1>, vector<8x128xf32>
      %379 = arith.addf %361, %378 : vector<8x128xf32>
      %380 = arith.mulf %379, %187 : vector<8x128xf32>
      %381 = vector.broadcast %88 : f32 to vector<8x128xf32>
      %382 = vector.broadcast %95 : f32 to vector<8x128xf32>
      %383 = arith.select %118, %381, %382 : vector<8x128xi1>, vector<8x128xf32>
      %384 = vector.broadcast %89 : f32 to vector<8x128xf32>
      %385 = arith.select %120, %384, %383 : vector<8x128xi1>, vector<8x128xf32>
      %386 = vector.broadcast %90 : f32 to vector<8x128xf32>
      %387 = arith.select %122, %386, %385 : vector<8x128xi1>, vector<8x128xf32>
      %388 = vector.broadcast %91 : f32 to vector<8x128xf32>
      %389 = arith.select %124, %388, %387 : vector<8x128xi1>, vector<8x128xf32>
      %390 = vector.broadcast %92 : f32 to vector<8x128xf32>
      %391 = arith.select %126, %390, %389 : vector<8x128xi1>, vector<8x128xf32>
      %392 = vector.broadcast %93 : f32 to vector<8x128xf32>
      %393 = arith.select %128, %392, %391 : vector<8x128xi1>, vector<8x128xf32>
      %394 = vector.broadcast %94 : f32 to vector<8x128xf32>
      %395 = arith.select %130, %394, %393 : vector<8x128xi1>, vector<8x128xf32>
      %396 = vector.broadcast %95 : f32 to vector<8x128xf32>
      %397 = arith.select %132, %396, %395 : vector<8x128xi1>, vector<8x128xf32>
      %398 = arith.addf %380, %397 : vector<8x128xf32>
      %399 = arith.mulf %398, %187 : vector<8x128xf32>
      %400 = vector.broadcast %80 : f32 to vector<8x128xf32>
      %401 = vector.broadcast %87 : f32 to vector<8x128xf32>
      %402 = arith.select %118, %400, %401 : vector<8x128xi1>, vector<8x128xf32>
      %403 = vector.broadcast %81 : f32 to vector<8x128xf32>
      %404 = arith.select %120, %403, %402 : vector<8x128xi1>, vector<8x128xf32>
      %405 = vector.broadcast %82 : f32 to vector<8x128xf32>
      %406 = arith.select %122, %405, %404 : vector<8x128xi1>, vector<8x128xf32>
      %407 = vector.broadcast %83 : f32 to vector<8x128xf32>
      %408 = arith.select %124, %407, %406 : vector<8x128xi1>, vector<8x128xf32>
      %409 = vector.broadcast %84 : f32 to vector<8x128xf32>
      %410 = arith.select %126, %409, %408 : vector<8x128xi1>, vector<8x128xf32>
      %411 = vector.broadcast %85 : f32 to vector<8x128xf32>
      %412 = arith.select %128, %411, %410 : vector<8x128xi1>, vector<8x128xf32>
      %413 = vector.broadcast %86 : f32 to vector<8x128xf32>
      %414 = arith.select %130, %413, %412 : vector<8x128xi1>, vector<8x128xf32>
      %415 = vector.broadcast %87 : f32 to vector<8x128xf32>
      %416 = arith.select %132, %415, %414 : vector<8x128xi1>, vector<8x128xf32>
      %417 = arith.addf %399, %416 : vector<8x128xf32>
      %c2_24 = arith.constant 2 : index
      %418 = arith.index_cast %114 : i32 to index
      %c0_25 = arith.constant 0 : index
      %419 = vector.load %arg5[%c2_24, %418, %c0_25] : memref<3x24x128xf32, #tpu.memory_space<vmem>>, vector<1x8x128xf32>
      %420 = vector.shape_cast %419 : vector<1x8x128xf32> to vector<8x128xf32>
      %421 = vector.shape_cast %417 : vector<8x128xf32> to vector<1x8x128xf32>
      tpu.vector_store %arg5[%c2_24, %418, %c0_25], %421 {strides = array<i32>} : memref<3x24x128xf32, #tpu.memory_space<vmem>>, vector<1x8x128xf32>,
    }
    %c3_i32_16 = arith.constant 3 : i32
    return
  }
  func.func @transform_0(%arg0: i32) -> i32 {
    %c0_i32 = arith.constant 0 : i32
    %c0_i32_0 = arith.constant 0 : i32
    return %c0_i32 : i32
  }
  func.func @transform_1(%arg0: i32) -> i32 {
    %c0_i32 = arith.constant 0 : i32
    %c0_i32_0 = arith.constant 0 : i32
    return %c0_i32 : i32
  }
  func.func @transform_2(%arg0: i32) -> i32 {
    %c0_i32 = arith.constant 0 : i32
    %c0_i32_0 = arith.constant 0 : i32
    return %c0_i32 : i32
  }
  func.func @transform_3(%arg0: i32) -> (i32, i32) {
    %c0_i32 = arith.constant 0 : i32
    %c0_i32_0 = arith.constant 0 : i32
    return %arg0, %c0_i32 : i32, i32
  }
  func.func @transform_4(%arg0: i32) -> (i32, i32, i32) {
    %c0_i32 = arith.constant 0 : i32
    %c0_i32_0 = arith.constant 0 : i32
    %c0_i32_1 = arith.constant 0 : i32
    return %c0_i32, %arg0, %c0_i32_0 : i32, i32, i32
  }
  func.func @transform_5(%arg0: i32) -> (i32, i32) {
    %c0_i32 = arith.constant 0 : i32
    %c0_i32_0 = arith.constant 0 : i32
    return %arg0, %c0_i32 : i32, i32
  }
}

</mosaic_0001>

<llo_original>
// kernel: tpu_custom_call.1
$region0: #{tpu_custom_call.1}
  #allocation0 [shape = 'u32[]', space=smem, size = 0x4, offset = 0x4, fixed_abs, tag = 'smem constant byte address 0x4 - core index']
  #allocation1 [shape = 'u32[144,128]{1,0:T(1,128)}', space=vmem, size = 0x12000, scoped, tag = 'internal scratch']
  #allocation14 [shape = 's32[]', space=sflag, size = 0x4, offset = 0, fixed_abs, tag = 'sflag constant byte address 0x0 - dummy sync flag']
  %s0 = inlined_call_operand.hbm [shape: f32[8], index: 0, kind: input, shape index: {}]
  %s1 = inlined_call_operand.vmem [shape: f32[8], index: 1, kind: input, shape index: {}]
  %s2 = inlined_call_operand.vmem [shape: f32[96], index: 2, kind: input, shape index: {}]
  %s3 = inlined_call_operand.hbm [shape: f32[48,128], index: 3, kind: input, shape index: {}]
  %s4 = inlined_call_operand.hbm [shape: f32[3,48,128], index: 4, kind: output, shape index: {0}]
  %s5 = inlined_call_operand.hbm [shape: s32[48,128], index: 5, kind: output, shape index: {1}]
  %6 = xla_tuple %s4, %s5
  %s7 = sld [smem:[#allocation0]]
  $region80: #{tpu_custom_call.1} parent=0
    _
  %s9 = ssub.s32 1, %s7
  %s10 = scalar_select 0, %s9, %s7
  $region1: #{tpu_custom_call.1} parent=0
    #allocation2 [shape = 'u8[512]{0}', space=smem, size = 0x200, scoped, tag = 'input window, operand 0, single buffered']
    #allocation3 [shape = 's32[2]{0}', space=sflag, size = 0x8, scoped, tag = 'scoped memory for tpu_custom_call.1']
    #allocation4 [shape = 's32[2]{0}', space=sflag, size = 0x8, scoped, tag = 'scoped memory for tpu_custom_call.1']
    #allocation5 [shape = 's32[2]{0}', space=sflag, size = 0x8, scoped, tag = 'scoped memory for tpu_custom_call.1']
    #allocation6 [shape = 's32[2]{0}', space=sflag, size = 0x8, scoped, tag = 'scoped memory for tpu_custom_call.1']
    #allocation7 [shape = 'u8[512]{0}', space=smem, size = 0x200, scoped, tag = 'input window, operand 1, single buffered']
    #allocation8 [shape = 'u8[512]{0}', space=smem, size = 0x200, scoped, tag = 'input window, operand 2, single buffered']
    #allocation9 [shape = 's32[1]{0}', space=sflag, size = 0x4, scoped, tag = 'scoped memory for tpu_custom_call.1']
    #allocation10 [shape = 'u8[24576]{0}', space=vmem, size = 0x6000, scoped, tag = 'input window, operand 3']
    #allocation11 [shape = 'u8[73728]{0}', space=vmem, size = 0x12000, scoped, tag = 'output window, operand 0']
    #allocation12 [shape = 'u8[24576]{0}', space=vmem, size = 0x6000, scoped, tag = 'output window, operand 1']
    #allocation13 [shape = 's32[2]{0}', space=sflag, size = 0x8, scoped, tag = 'scoped memory for tpu_custom_call.1']
    %11 = vsyncpa [#allocation5], 0
    %12 = vsyncpa [#allocation6], 0
    %13 = vsyncpa [#allocation9], 0
    %14 = vsyncpa [#allocation3], 0
    %s15 = scalar_lea.sflag [#allocation3], 1
    %16 = vsyncpa %s15, 0
    %17 = vsyncpa [#allocation4], 0
    %s18 = scalar_lea.sflag [#allocation4], 1
    %19 = vsyncpa %s18, 0
    %20 = vsyncpa [#allocation13], 0
    %s21 = scalar_lea.sflag [#allocation13], 1
    %22 = vsyncpa %s21, 0
    loop: start=0, step=1, limit=4
    $region2: #{tpu_custom_call.1} parent=1 // loop_pre_header
      _
    $region3: #{tpu_custom_call.1} parent=1 // loop_header
      %s24 = sphi 0, %s28
      %p25 = scmp.ge.s32.totalorder %s24, 4
      %s32 = sphi 0, %s32
      %s34 = sphi 0, %s32
      %s35 = sphi 0, %s34
      %s49 = sphi 0, %s35
      %s53 = sphi 0, %s53
      %s55 = sphi 0, %s53
      %s56 = sphi 0, %s55
      %s70 = sphi 0, %s56
      %s74 = sphi 0, %s74
      %s76 = sphi 0, %s74
      %s77 = sphi 0, %s76
      %s91 = sphi 0, %s77
      %s97 = sphi 0, %s99
      %s100 = sphi 0, %s97
      %s101 = sphi 0, %s100
      %s117 = sphi 0, %s101
      %s123 = sphi 0, %s125
      %s126 = sphi 0, %s123
      %s127 = sphi 0, %s126
      %s143 = sphi 0, %s127
      %s149 = sphi 0, %s151
      %s152 = sphi 0, %s149
      %s153 = sphi 0, %s152
      %s169 = sphi 0, %s153
    $region4: #{tpu_custom_call.1} parent=1 // loop_header_branch
      %27 = sbr.rel (%p25) target = $region8
    $region5: #{tpu_custom_call.1} parent=1 // loop_body
      %s29 = ssub.s32 %s24, 1
      %s30 = ssub.s32 %s24, 2
      %s31 = sadd.s32 %s24, 1
      %s33 = sadd.s32 %s32, 1
      %p36 = scmp.eq.s32.totalorder %s24, 1
      %p37 = scmp.ne.s32.totalorder %s32, %s34
      %p38 = scmp.eq.s32.totalorder %s24, 0
      %p39 = por %p37, %p38
      %p40 = scmp.ne.s32.totalorder %s32, %s34
      %p41 = scmp.eq.s32.totalorder %s29, 1
      %p42 = por %p40, %p41
      %p43 = scmp.ne.s32.totalorder %s34, %s35
      %p44 = scmp.eq.s32.totalorder %s29, 0
      %p45 = por %p43, %p44
      %p46 = scmp.ne.s32.totalorder %s34, %s35
      %p47 = scmp.eq.s32.totalorder %s30, 1
      %p48 = por %p46, %p47
      %p50 = scmp.ne.s32.totalorder %s35, %s49
      %p51 = scmp.eq.s32.totalorder %s30, 0
      %p52 = por %p50, %p51
      %s54 = sadd.s32 %s53, 1
      %p57 = scmp.eq.s32.totalorder %s24, 1
      %p58 = scmp.ne.s32.totalorder %s53, %s55
      %p59 = scmp.eq.s32.totalorder %s24, 0
      %p60 = por %p58, %p59
      %p61 = scmp.ne.s32.totalorder %s53, %s55
      %p62 = scmp.eq.s32.totalorder %s29, 1
      %p63 = por %p61, %p62
      %p64 = scmp.ne.s32.totalorder %s55, %s56
      %p65 = scmp.eq.s32.totalorder %s29, 0
      %p66 = por %p64, %p65
      %p67 = scmp.ne.s32.totalorder %s55, %s56
      %p68 = scmp.eq.s32.totalorder %s30, 1
      %p69 = por %p67, %p68
      %p71 = scmp.ne.s32.totalorder %s56, %s70
      %p72 = scmp.eq.s32.totalorder %s30, 0
      %p73 = por %p71, %p72
      %s75 = sadd.s32 %s74, 1
      %p78 = scmp.eq.s32.totalorder %s24, 1
      %p79 = scmp.ne.s32.totalorder %s74, %s76
      %p80 = scmp.eq.s32.totalorder %s24, 0
      %p81 = por %p79, %p80
      %p82 = scmp.ne.s32.totalorder %s74, %s76
      %p83 = scmp.eq.s32.totalorder %s29, 1
      %p84 = por %p82, %p83
      %p85 = scmp.ne.s32.totalorder %s76, %s77
      %p86 = scmp.eq.s32.totalorder %s29, 0
      %p87 = por %p85, %p86
      %p88 = scmp.ne.s32.totalorder %s76, %s77
      %p89 = scmp.eq.s32.totalorder %s30, 1
      %p90 = por %p88, %p89
      %p92 = scmp.ne.s32.totalorder %s77, %s91
      %p93 = scmp.eq.s32.totalorder %s30, 0
      %p94 = por %p92, %p93
      %s95 = ssub.s32 %s24, %s31
      %p96 = scmp.eq.s32.totalorder %s95, 0
      %s98 = sadd.s32 %s97, 1
      %s99 = scalar_select %p96, %s97, %s98
      %p102 = pneg %p96
      %p103 = scmp.eq.s32.totalorder %s24, 1
      %p104 = por %p102, %p103
      %p105 = scmp.ne.s32.totalorder %s97, %s100
      %p106 = scmp.eq.s32.totalorder %s24, 0
      %p107 = por %p105, %p106
      %p108 = scmp.ne.s32.totalorder %s97, %s100
      %p109 = scmp.eq.s32.totalorder %s29, 1
      %p110 = por %p108, %p109
      %p111 = scmp.ne.s32.totalorder %s100, %s101
      %p112 = scmp.eq.s32.totalorder %s29, 0
      %p113 = por %p111, %p112
      %p114 = scmp.ne.s32.totalorder %s100, %s101
      %p115 = scmp.eq.s32.totalorder %s30, 1
      %p116 = por %p114, %p115
      %p118 = scmp.ne.s32.totalorder %s101, %s117
      %p119 = scmp.eq.s32.totalorder %s30, 0
      %p120 = por %p118, %p119
      %s121 = ssub.s32 %s24, %s31
      %p122 = scmp.eq.s32.totalorder %s121, 0
      %s124 = sadd.s32 %s123, 1
      %s125 = scalar_select %p122, %s123, %s124
      %p128 = pneg %p122
      %p129 = scmp.eq.s32.totalorder %s24, 1
      %p130 = por %p128, %p129
      %p131 = scmp.ne.s32.totalorder %s123, %s126
      %p132 = scmp.eq.s32.totalorder %s24, 0
      %p133 = por %p131, %p132
      %p134 = scmp.ne.s32.totalorder %s123, %s126
      %p135 = scmp.eq.s32.totalorder %s29, 1
      %p136 = por %p134, %p135
      %p137 = scmp.ne.s32.totalorder %s126, %s127
      %p138 = scmp.eq.s32.totalorder %s29, 0
      %p139 = por %p137, %p138
      %p140 = scmp.ne.s32.totalorder %s126, %s127
      %p141 = scmp.eq.s32.totalorder %s30, 1
      %p142 = por %p140, %p141
      %p144 = scmp.ne.s32.totalorder %s127, %s143
      %p145 = scmp.eq.s32.totalorder %s30, 0
      %p146 = por %p144, %p145
      %s147 = ssub.s32 %s24, %s31
      %p148 = scmp.eq.s32.totalorder %s147, 0
      %s150 = sadd.s32 %s149, 1
      %s151 = scalar_select %p148, %s149, %s150
      %p154 = pneg %p148
      %p155 = scmp.eq.s32.totalorder %s24, 1
      %p156 = por %p154, %p155
      %p157 = scmp.ne.s32.totalorder %s149, %s152
      %p158 = scmp.eq.s32.totalorder %s24, 0
      %p159 = por %p157, %p158
      %p160 = scmp.ne.s32.totalorder %s149, %s152
      %p161 = scmp.eq.s32.totalorder %s29, 1
      %p162 = por %p160, %p161
      %p163 = scmp.ne.s32.totalorder %s152, %s153
      %p164 = scmp.eq.s32.totalorder %s29, 0
      %p165 = por %p163, %p164
      %p166 = scmp.ne.s32.totalorder %s152, %s153
      %p167 = scmp.eq.s32.totalorder %s30, 1
      %p168 = por %p166, %p167
      %p170 = scmp.ne.s32.totalorder %s153, %s169
      %p171 = scmp.eq.s32.totalorder %s30, 0
      %p172 = por %p170, %p171
      %p173 = scmp.le.s32.totalorder 1, %s24
      %p174 = scmp.lt.s32.totalorder %s24, 3
      %p175 = pnand %p173, %p174
      %p176 = pneg %p175
      // Predicated region
      $region9: #{tpu_custom_call.1} parent=5 // pred_check
        _
      $region10: #{tpu_custom_call.1} parent=5 // pred_check_branch
        %178 = sbr.rel (%p175) target = $region12
      $region11: #{tpu_custom_call.1} parent=5 // pred_region
        %s179 = ssub.s32 %s24, 1
        // Predicated region
        $region13: #{tpu_custom_call.1} parent=11 // pred_check
          %p180 = pneg %p45
        $region14: #{tpu_custom_call.1} parent=11 // pred_check_branch
          %182 = sbr.rel (%p180) target = $region16
        $region15: #{tpu_custom_call.1} parent=11 // pred_region
          %s184 = ssub.s32 16, 16
          %185 = vsyncadd [#allocation5], %s184
          %188 = dma.hbm_to_smem %s0, 16, [#allocation2], [#allocation5]
        $region16: #{tpu_custom_call.1} parent=11 // pred_fallthru
          _
        // Predicated region
        $region17: #{tpu_custom_call.1} parent=11 // pred_check
          %p189 = pneg %p66
        $region18: #{tpu_custom_call.1} parent=11 // pred_check_branch
          %191 = sbr.rel (%p189) target = $region20
        $region19: #{tpu_custom_call.1} parent=11 // pred_region
          %s193 = ssub.s32 16, 16
          %194 = vsyncadd [#allocation6], %s193
          %s196 = sshll.u32 %s1, 4
          %s197 = int_to_ptr.vmem [resolvable:$true] %s196
          %199 = dma.vmem_to_smem %s197, 16, [#allocation7], [#allocation6]
        $region20: #{tpu_custom_call.1} parent=11 // pred_fallthru
          _
        // Predicated region
        $region21: #{tpu_custom_call.1} parent=11 // pred_check
          %p200 = pneg %p87
        $region22: #{tpu_custom_call.1} parent=11 // pred_check_branch
          %202 = sbr.rel (%p200) target = $region24
        $region23: #{tpu_custom_call.1} parent=11 // pred_region
          %s204 = ssub.s32 16, 16
          %205 = vsyncadd [#allocation9], %s204
          %s207 = sshll.u32 %s2, 4
          %s208 = int_to_ptr.vmem [resolvable:$true] %s207
          %210 = dma.vmem_to_smem %s208, 16, [#allocation8], [#allocation9]
        $region24: #{tpu_custom_call.1} parent=11 // pred_fallthru
          _
      $region12: #{tpu_custom_call.1} parent=5 // pred_fallthru
        _
      %p211 = scmp.lt.s32.totalorder %s24, 2
      // Predicated region
      $region25: #{tpu_custom_call.1} parent=5 // pred_check
        %p212 = pneg %p211
      $region26: #{tpu_custom_call.1} parent=5 // pred_check_branch
        %214 = sbr.rel (%p212) target = $region28
      $region27: #{tpu_custom_call.1} parent=5 // pred_region
        // Predicated region
        $region29: #{tpu_custom_call.1} parent=27 // pred_check
          %p215 = pneg %p107
        $region30: #{tpu_custom_call.1} parent=27 // pred_check_branch
          %217 = sbr.rel (%p215) target = $region32
        $region31: #{tpu_custom_call.1} parent=27 // pred_region
          %s218 = sand.u32 %s97, 1
          %s219 = scalar_lea.sflag [#allocation3], %s218
          %s220 = sand.u32 %s97, 1
          %s221 = smul.addr %s220, 24
          %s222 = scalar_lea.vmem [#allocation10], %s221
          %s223 = smul.u32 3, %s24
          %s225 = ssub.s32 384, 384
          %226 = vsyncadd %s219, %s225
          %s227 = smul.addr %s223, 128
          %s228 = scalar_lea.hbm %s3, %s227
          %s229 = sshll.u32 %s222, 4
          %s230 = int_to_ptr.vmem [resolvable:$true] %s229
          %235 = dma.hbm_to_vmem [thread:$0]  %s228, 384, %s230, %s219, 128, 128, 8
        $region32: #{tpu_custom_call.1} parent=27 // pred_fallthru
          _
      $region28: #{tpu_custom_call.1} parent=5 // pred_fallthru
        _
      %p236 = scmp.le.s32.totalorder 1, %s24
      %p237 = scmp.lt.s32.totalorder %s24, 3
      %p238 = pnand %p236, %p237
      %p239 = pneg %p238
      // Predicated region
      $region33: #{tpu_custom_call.1} parent=5 // pred_check
        _
      $region34: #{tpu_custom_call.1} parent=5 // pred_check_branch
        %241 = sbr.rel (%p238) target = $region36
      $region35: #{tpu_custom_call.1} parent=5 // pred_region
        %s242 = ssub.s32 %s24, 1
        // Predicated region
        $region37: #{tpu_custom_call.1} parent=35 // pred_check
          %p243 = pneg %p45
        $region38: #{tpu_custom_call.1} parent=35 // pred_check_branch
          %245 = sbr.rel (%p243) target = $region40
        $region39: #{tpu_custom_call.1} parent=35 // pred_region
          %246 = dma.done [#allocation5], 16
        $region40: #{tpu_custom_call.1} parent=35 // pred_fallthru
          _
        // Predicated region
        $region41: #{tpu_custom_call.1} parent=35 // pred_check
          %p247 = pneg %p66
        $region42: #{tpu_custom_call.1} parent=35 // pred_check_branch
          %249 = sbr.rel (%p247) target = $region44
        $region43: #{tpu_custom_call.1} parent=35 // pred_region
          %250 = dma.done [#allocation6], 16
        $region44: #{tpu_custom_call.1} parent=35 // pred_fallthru
          _
        // Predicated region
        $region45: #{tpu_custom_call.1} parent=35 // pred_check
          %p251 = pneg %p87
        $region46: #{tpu_custom_call.1} parent=35 // pred_check_branch
          %253 = sbr.rel (%p251) target = $region48
        $region47: #{tpu_custom_call.1} parent=35 // pred_region
          %254 = dma.done [#allocation9], 16
        $region48: #{tpu_custom_call.1} parent=35 // pred_fallthru
          _
        %s255 = sand.u32 %s100, 1
        %s256 = scalar_lea.sflag [#allocation3], %s255
        %s257 = sand.u32 %s100, 1
        %s258 = smul.addr %s257, 24
        %s259 = scalar_lea.vmem [#allocation10], %s258
        // Predicated region
        $region49: #{tpu_custom_call.1} parent=35 // pred_check
          %p260 = pneg %p113
        $region50: #{tpu_custom_call.1} parent=35 // pred_check_branch
          %262 = sbr.rel (%p260) target = $region52
        $region51: #{tpu_custom_call.1} parent=35 // pred_region
          %263 = dma.done %s256, 384
        $region52: #{tpu_custom_call.1} parent=35 // pred_fallthru
          _
        %264 = sfence
        %p265 = pneg %p45
        %p266 = pneg %p42
        %p267 = pneg %p66
        %p268 = pneg %p63
        %p269 = pneg %p87
        %p270 = pneg %p84
        %s271 = sand.u32 %s100, 1
        %s272 = scalar_lea.sflag [#allocation3], %s271
        %s273 = sand.u32 %s100, 1
        %s274 = smul.addr %s273, 24
        %s275 = scalar_lea.vmem [#allocation10], %s274
        %p276 = pneg %p113
        %p277 = pneg %p110
        %p278 = pneg %p139
        %p279 = pneg %p136
        %s280 = sand.u32 %s126, 1
        %s281 = scalar_lea.sflag [#allocation4], %s280
        %s282 = sand.u32 %s126, 1
        %s283 = smul.addr %s282, 72
        %s284 = scalar_lea.vmem [#allocation11], %s283
        %p285 = pneg %p165
        %p286 = pneg %p162
        %s287 = sand.u32 %s152, 1
        %s288 = scalar_lea.sflag [#allocation13], %s287
        %s289 = sand.u32 %s152, 1
        %s290 = smul.addr %s289, 24
        %s291 = scalar_lea.vmem [#allocation12], %s290
        %s292 = smul.u32 3, %s29
        %s293 = smul.u32 3, %s29
        %s294 = smul.u32 3, %s29
        %s295 = sld [smem:[#allocation2]]
        %s296 = sld [smem:[#allocation2 + $0x1]]
        %s297 = sld [smem:[#allocation2 + $0x2]]
        %s298 = sld [smem:[#allocation2 + $0x3]]
        %s299 = sld [smem:[#allocation2 + $0x4]]
        %s300 = sld [smem:[#allocation2 + $0x5]]
        %s301 = sld [smem:[#allocation2 + $0x6]]
        %s302 = sld [smem:[#allocation2 + $0x7]]
        %s303 = sld [smem:[#allocation7]]
        %s304 = sld [smem:[#allocation7 + $0x1]]
        %s305 = sld [smem:[#allocation7 + $0x2]]
        %s306 = sld [smem:[#allocation7 + $0x3]]
        %s307 = sld [smem:[#allocation7 + $0x4]]
        %s308 = sld [smem:[#allocation7 + $0x5]]
        %s309 = sld [smem:[#allocation7 + $0x6]]
        %s310 = sld [smem:[#allocation7 + $0x7]]
        %s311 = sld [smem:[#allocation8]]
        %s312 = sld [smem:[#allocation8 + $0xc]]
        %s313 = sld [smem:[#allocation8 + $0x18]]
        %s314 = sld [smem:[#allocation8 + $0x24]]
        %s315 = sld [smem:[#allocation8 + $0x30]]
        %s316 = sld [smem:[#allocation8 + $0x3c]]
        %s317 = sld [smem:[#allocation8 + $0x48]]
        %s318 = sld [smem:[#allocation8 + $0x54]]
        %s319 = sld [smem:[#allocation8 + $0x3]]
        %s320 = sld [smem:[#allocation8 + $0xf]]
        %s321 = sld [smem:[#allocation8 + $0x1b]]
        %s322 = sld [smem:[#allocation8 + $0x27]]
        %s323 = sld [smem:[#allocation8 + $0x33]]
        %s324 = sld [smem:[#allocation8 + $0x3f]]
        %s325 = sld [smem:[#allocation8 + $0x4b]]
        %s326 = sld [smem:[#allocation8 + $0x57]]
        %s327 = sld [smem:[#allocation8 + $0x6]]
        %s328 = sld [smem:[#allocation8 + $0x12]]
        %s329 = sld [smem:[#allocation8 + $0x1e]]
        %s330 = sld [smem:[#allocation8 + $0x2a]]
        %s331 = sld [smem:[#allocation8 + $0x36]]
        %s332 = sld [smem:[#allocation8 + $0x42]]
        %s333 = sld [smem:[#allocation8 + $0x4e]]
        %s334 = sld [smem:[#allocation8 + $0x5a]]
        %s335 = sld [smem:[#allocation8 + $0x9]]
        %s336 = sld [smem:[#allocation8 + $0x15]]
        %s337 = sld [smem:[#allocation8 + $0x21]]
        %s338 = sld [smem:[#allocation8 + $0x2d]]
        %s339 = sld [smem:[#allocation8 + $0x39]]
        %s340 = sld [smem:[#allocation8 + $0x45]]
        %s341 = sld [smem:[#allocation8 + $0x51]]
        %s342 = sld [smem:[#allocation8 + $0x5d]]
        %s343 = sld [smem:[#allocation8 + $0x1]]
        %s344 = sld [smem:[#allocation8 + $0xd]]
        %s345 = sld [smem:[#allocation8 + $0x19]]
        %s346 = sld [smem:[#allocation8 + $0x25]]
        %s347 = sld [smem:[#allocation8 + $0x31]]
        %s348 = sld [smem:[#allocation8 + $0x3d]]
        %s349 = sld [smem:[#allocation8 + $0x49]]
        %s350 = sld [smem:[#allocation8 + $0x55]]
        %s351 = sld [smem:[#allocation8 + $0x4]]
        %s352 = sld [smem:[#allocation8 + $0x10]]
        %s353 = sld [smem:[#allocation8 + $0x1c]]
        %s354 = sld [smem:[#allocation8 + $0x28]]
        %s355 = sld [smem:[#allocation8 + $0x34]]
        %s356 = sld [smem:[#allocation8 + $0x40]]
        %s357 = sld [smem:[#allocation8 + $0x4c]]
        %s358 = sld [smem:[#allocation8 + $0x58]]
        %s359 = sld [smem:[#allocation8 + $0x7]]
        %s360 = sld [smem:[#allocation8 + $0x13]]
        %s361 = sld [smem:[#allocation8 + $0x1f]]
        %s362 = sld [smem:[#allocation8 + $0x2b]]
        %s363 = sld [smem:[#allocation8 + $0x37]]
        %s364 = sld [smem:[#allocation8 + $0x43]]
        %s365 = sld [smem:[#allocation8 + $0x4f]]
        %s366 = sld [smem:[#allocation8 + $0x5b]]
        %s367 = sld [smem:[#allocation8 + $0xa]]
        %s368 = sld [smem:[#allocation8 + $0x16]]
        %s369 = sld [smem:[#allocation8 + $0x22]]
        %s370 = sld [smem:[#allocation8 + $0x2e]]
        %s371 = sld [smem:[#allocation8 + $0x3a]]
        %s372 = sld [smem:[#allocation8 + $0x46]]
        %s373 = sld [smem:[#allocation8 + $0x52]]
        %s374 = sld [smem:[#allocation8 + $0x5e]]
        %s375 = sld [smem:[#allocation8 + $0x2]]
        %s376 = sld [smem:[#allocation8 + $0xe]]
        %s377 = sld [smem:[#allocation8 + $0x1a]]
        %s378 = sld [smem:[#allocation8 + $0x26]]
        %s379 = sld [smem:[#allocation8 + $0x32]]
        %s380 = sld [smem:[#allocation8 + $0x3e]]
        %s381 = sld [smem:[#allocation8 + $0x4a]]
        %s382 = sld [smem:[#allocation8 + $0x56]]
        %s383 = sld [smem:[#allocation8 + $0x5]]
        %s384 = sld [smem:[#allocation8 + $0x11]]
        %s385 = sld [smem:[#allocation8 + $0x1d]]
        %s386 = sld [smem:[#allocation8 + $0x29]]
        %s387 = sld [smem:[#allocation8 + $0x35]]
        %s388 = sld [smem:[#allocation8 + $0x41]]
        %s389 = sld [smem:[#allocation8 + $0x4d]]
        %s390 = sld [smem:[#allocation8 + $0x59]]
        %s391 = sld [smem:[#allocation8 + $0x8]]
        %s392 = sld [smem:[#allocation8 + $0x14]]
        %s393 = sld [smem:[#allocation8 + $0x20]]
        %s394 = sld [smem:[#allocation8 + $0x2c]]
        %s395 = sld [smem:[#allocation8 + $0x38]]
        %s396 = sld [smem:[#allocation8 + $0x44]]
        %s397 = sld [smem:[#allocation8 + $0x50]]
        %s398 = sld [smem:[#allocation8 + $0x5c]]
        %s399 = sld [smem:[#allocation8 + $0xb]]
        %s400 = sld [smem:[#allocation8 + $0x17]]
        %s401 = sld [smem:[#allocation8 + $0x23]]
        %s402 = sld [smem:[#allocation8 + $0x2f]]
        %s403 = sld [smem:[#allocation8 + $0x3b]]
        %s404 = sld [smem:[#allocation8 + $0x47]]
        %s405 = sld [smem:[#allocation8 + $0x53]]
        %s406 = sld [smem:[#allocation8 + $0x5f]]
        loop: start=0, step=1, limit=3
        $region53: #{tpu_custom_call.1} parent=35 // loop_pre_header
          _
        $region54: #{tpu_custom_call.1} parent=35 // loop_header
          %s408 = sphi 0, %s412
          %p409 = scmp.ge.s32.totalorder %s408, 3
        $region55: #{tpu_custom_call.1} parent=35 // loop_header_branch
          %411 = sbr.rel (%p409) target = $region59
        $region56: #{tpu_custom_call.1} parent=35 // loop_body
          %s413 = smul.u32 %s408, 8
          %s414 = scalar_lea.vmem %s259, %s413 [#allocation10]
          %v415 = vld [vmem:[%s414] sm:$0xff]
          %v416 = vstv %s295
          %vm417 = vcmp.ge.f32.partialorder %v415, %v416
          %v418 = vstv %s296
          %vm419 = vcmp.ge.f32.partialorder %v415, %v418
          %v420 = vstv %s297
          %vm421 = vcmp.ge.f32.partialorder %v415, %v420
          %v422 = vstv %s298
          %vm423 = vcmp.ge.f32.partialorder %v415, %v422
          %v424 = vstv %s299
          %vm425 = vcmp.ge.f32.partialorder %v415, %v424
          %v426 = vstv %s300
          %vm427 = vcmp.ge.f32.partialorder %v415, %v426
          %v428 = vstv %s301
          %vm429 = vcmp.ge.f32.partialorder %v415, %v428
          %v430 = vstv %s302
          %vm431 = vcmp.ge.f32.partialorder %v415, %v430
          %v432 = vsel %vm417, 1, 0
          %v433 = vsel %vm419, 1, 0
          %v434 = vadd.s32 %v432, %v433
          %v435 = vsel %vm421, 1, 0
          %v436 = vadd.s32 %v434, %v435
          %v437 = vsel %vm423, 1, 0
          %v438 = vadd.s32 %v436, %v437
          %v439 = vsel %vm425, 1, 0
          %v440 = vadd.s32 %v438, %v439
          %v441 = vsel %vm427, 1, 0
          %v442 = vadd.s32 %v440, %v441
          %v443 = vsel %vm429, 1, 0
          %v444 = vadd.s32 %v442, %v443
          %v445 = vsel %vm431, 1, 0
          %v446 = vadd.s32 %v444, %v445
          %v447 = vsub.s32 %v446, 1
          %s448 = scalar_lea.vmem %s291, %s413 [#allocation12]
          %449 = vst [vmem:[%s448] sm:$0xff] %v447
          %v450 = vsel %vm417, %v416, %v430
          %v451 = vsel %vm419, %v418, %v450
          %v452 = vsel %vm421, %v420, %v451
          %v453 = vsel %vm423, %v422, %v452
          %v454 = vsel %vm425, %v424, %v453
          %v455 = vsel %vm427, %v426, %v454
          %v456 = vsel %vm429, %v428, %v455
          %v457 = vsel %vm431, %v430, %v456
          %v458 = vsub.f32 %v415, %v457
          %v459 = vstv %s303
          %v460 = vstv %s310
          %v461 = vsel %vm417, %v459, %v460
          %v462 = vstv %s304
          %v463 = vsel %vm419, %v462, %v461
          %v464 = vstv %s305
          %v465 = vsel %vm421, %v464, %v463
          %v466 = vstv %s306
          %v467 = vsel %vm423, %v466, %v465
          %v468 = vstv %s307
          %v469 = vsel %vm425, %v468, %v467
          %v470 = vstv %s308
          %v471 = vsel %vm427, %v470, %v469
          %v472 = vstv %s309
          %v473 = vsel %vm429, %v472, %v471
          %v474 = vsel %vm431, %v460, %v473
          %v475 = vmul.f32 %v458, %v474
          %v476 = vstv %s335
          %v477 = vstv %s342
          %v478 = vsel %vm417, %v476, %v477
          %v479 = vstv %s336
          %v480 = vsel %vm419, %v479, %v478
          %v481 = vstv %s337
          %v482 = vsel %vm421, %v481, %v480
          %v483 = vstv %s338
          %v484 = vsel %vm423, %v483, %v482
          %v485 = vstv %s339
          %v486 = vsel %vm425, %v485, %v484
          %v487 = vstv %s340
          %v488 = vsel %vm427, %v487, %v486
          %v489 = vstv %s341
          %v490 = vsel %vm429, %v489, %v488
          %v491 = vsel %vm431, %v477, %v490
          %v492 = vmul.f32 %v491, %v475
          %v493 = vstv %s327
          %v494 = vstv %s334
          %v495 = vsel %vm417, %v493, %v494
          %v496 = vstv %s328
          %v497 = vsel %vm419, %v496, %v495
          %v498 = vstv %s329
          %v499 = vsel %vm421, %v498, %v497
          %v500 = vstv %s330
          %v501 = vsel %vm423, %v500, %v499
          %v502 = vstv %s331
          %v503 = vsel %vm425, %v502, %v501
          %v504 = vstv %s332
          %v505 = vsel %vm427, %v504, %v503
          %v506 = vstv %s333
          %v507 = vsel %vm429, %v506, %v505
          %v508 = vsel %vm431, %v494, %v507
          %v509 = vadd.f32 %v492, %v508
          %v510 = vmul.f32 %v509, %v475
          %v511 = vstv %s319
          %v512 = vstv %s326
          %v513 = vsel %vm417, %v511, %v512
          %v514 = vstv %s320
          %v515 = vsel %vm419, %v514, %v513
          %v516 = vstv %s321
          %v517 = vsel %vm421, %v516, %v515
          %v518 = vstv %s322
          %v519 = vsel %vm423, %v518, %v517
          %v520 = vstv %s323
          %v521 = vsel %vm425, %v520, %v519
          %v522 = vstv %s324
          %v523 = vsel %vm427, %v522, %v521
          %v524 = vstv %s325
          %v525 = vsel %vm429, %v524, %v523
          %v526 = vsel %vm431, %v512, %v525
          %v527 = vadd.f32 %v510, %v526
          %v528 = vmul.f32 %v527, %v475
          %v529 = vstv %s311
          %v530 = vstv %s318
          %v531 = vsel %vm417, %v529, %v530
          %v532 = vstv %s312
          %v533 = vsel %vm419, %v532, %v531
          %v534 = vstv %s313
          %v535 = vsel %vm421, %v534, %v533
          %v536 = vstv %s314
          %v537 = vsel %vm423, %v536, %v535
          %v538 = vstv %s315
          %v539 = vsel %vm425, %v538, %v537
          %v540 = vstv %s316
          %v541 = vsel %vm427, %v540, %v539
          %v542 = vstv %s317
          %v543 = vsel %vm429, %v542, %v541
          %v544 = vsel %vm431, %v530, %v543
          %v545 = vadd.f32 %v528, %v544
          %s546 = scalar_lea.vmem %s284, %s413 [#allocation11]
          %547 = vst [vmem:[%s546] sm:$0xff] %v545
          %v548 = vstv %s367
          %v549 = vstv %s374
          %v550 = vsel %vm417, %v548, %v549
          %v551 = vstv %s368
          %v552 = vsel %vm419, %v551, %v550
          %v553 = vstv %s369
          %v554 = vsel %vm421, %v553, %v552
          %v555 = vstv %s370
          %v556 = vsel %vm423, %v555, %v554
          %v557 = vstv %s371
          %v558 = vsel %vm425, %v557, %v556
          %v559 = vstv %s372
          %v560 = vsel %vm427, %v559, %v558
          %v561 = vstv %s373
          %v562 = vsel %vm429, %v561, %v560
          %v563 = vsel %vm431, %v549, %v562
          %v564 = vmul.f32 %v563, %v475
          %v565 = vstv %s359
          %v566 = vstv %s366
          %v567 = vsel %vm417, %v565, %v566
          %v568 = vstv %s360
          %v569 = vsel %vm419, %v568, %v567
          %v570 = vstv %s361
          %v571 = vsel %vm421, %v570, %v569
          %v572 = vstv %s362
          %v573 = vsel %vm423, %v572, %v571
          %v574 = vstv %s363
          %v575 = vsel %vm425, %v574, %v573
          %v576 = vstv %s364
          %v577 = vsel %vm427, %v576, %v575
          %v578 = vstv %s365
          %v579 = vsel %vm429, %v578, %v577
          %v580 = vsel %vm431, %v566, %v579
          %v581 = vadd.f32 %v564, %v580
          %v582 = vmul.f32 %v581, %v475
          %v583 = vstv %s351
          %v584 = vstv %s358
          %v585 = vsel %vm417, %v583, %v584
          %v586 = vstv %s352
          %v587 = vsel %vm419, %v586, %v585
          %v588 = vstv %s353
          %v589 = vsel %vm421, %v588, %v587
          %v590 = vstv %s354
          %v591 = vsel %vm423, %v590, %v589
          %v592 = vstv %s355
          %v593 = vsel %vm425, %v592, %v591
          %v594 = vstv %s356
          %v595 = vsel %vm427, %v594, %v593
          %v596 = vstv %s357
          %v597 = vsel %vm429, %v596, %v595
          %v598 = vsel %vm431, %v584, %v597
          %v599 = vadd.f32 %v582, %v598
          %v600 = vmul.f32 %v599, %v475
          %v601 = vstv %s343
          %v602 = vstv %s350
          %v603 = vsel %vm417, %v601, %v602
          %v604 = vstv %s344
          %v605 = vsel %vm419, %v604, %v603
          %v606 = vstv %s345
          %v607 = vsel %vm421, %v606, %v605
          %v608 = vstv %s346
          %v609 = vsel %vm423, %v608, %v607
          %v610 = vstv %s347
          %v611 = vsel %vm425, %v610, %v609
          %v612 = vstv %s348
          %v613 = vsel %vm427, %v612, %v611
          %v614 = vstv %s349
          %v615 = vsel %vm429, %v614, %v613
          %v616 = vsel %vm431, %v602, %v615
          %v617 = vadd.f32 %v600, %v616
          %s618 = sadd.s32 %s413, 24
          %s619 = scalar_lea.vmem %s284, %s618 [#allocation11]
          %620 = vst [vmem:[%s619] sm:$0xff] %v617
          %v621 = vstv %s399
          %v622 = vstv %s406
          %v623 = vsel %vm417, %v621, %v622
          %v624 = vstv %s400
          %v625 = vsel %vm419, %v624, %v623
          %v626 = vstv %s401
          %v627 = vsel %vm421, %v626, %v625
          %v628 = vstv %s402
          %v629 = vsel %vm423, %v628, %v627
          %v630 = vstv %s403
          %v631 = vsel %vm425, %v630, %v629
          %v632 = vstv %s404
          %v633 = vsel %vm427, %v632, %v631
          %v634 = vstv %s405
          %v635 = vsel %vm429, %v634, %v633
          %v636 = vsel %vm431, %v622, %v635
          %v637 = vmul.f32 %v636, %v475
          %v638 = vstv %s391
          %v639 = vstv %s398
          %v640 = vsel %vm417, %v638, %v639
          %v641 = vstv %s392
          %v642 = vsel %vm419, %v641, %v640
          %v643 = vstv %s393
          %v644 = vsel %vm421, %v643, %v642
          %v645 = vstv %s394
          %v646 = vsel %vm423, %v645, %v644
          %v647 = vstv %s395
          %v648 = vsel %vm425, %v647, %v646
          %v649 = vstv %s396
          %v650 = vsel %vm427, %v649, %v648
          %v651 = vstv %s397
          %v652 = vsel %vm429, %v651, %v650
          %v653 = vsel %vm431, %v639, %v652
          %v654 = vadd.f32 %v637, %v653
          %v655 = vmul.f32 %v654, %v475
          %v656 = vstv %s383
          %v657 = vstv %s390
          %v658 = vsel %vm417, %v656, %v657
          %v659 = vstv %s384
          %v660 = vsel %vm419, %v659, %v658
          %v661 = vstv %s385
          %v662 = vsel %vm421, %v661, %v660
          %v663 = vstv %s386
          %v664 = vsel %vm423, %v663, %v662
          %v665 = vstv %s387
          %v666 = vsel %vm425, %v665, %v664
          %v667 = vstv %s388
          %v668 = vsel %vm427, %v667, %v666
          %v669 = vstv %s389
          %v670 = vsel %vm429, %v669, %v668
          %v671 = vsel %vm431, %v657, %v670
          %v672 = vadd.f32 %v655, %v671
          %v673 = vmul.f32 %v672, %v475
          %v674 = vstv %s375
          %v675 = vstv %s382
          %v676 = vsel %vm417, %v674, %v675
          %v677 = vstv %s376
          %v678 = vsel %vm419, %v677, %v676
          %v679 = vstv %s377
          %v680 = vsel %vm421, %v679, %v678
          %v681 = vstv %s378
          %v682 = vsel %vm423, %v681, %v680
          %v683 = vstv %s379
          %v684 = vsel %vm425, %v683, %v682
          %v685 = vstv %s380
          %v686 = vsel %vm427, %v685, %v684
          %v687 = vstv %s381
          %v688 = vsel %vm429, %v687, %v686
          %v689 = vsel %vm431, %v675, %v688
          %v690 = vadd.f32 %v673, %v689
          %s691 = sadd.s32 %s413, 48
          %s692 = scalar_lea.vmem %s284, %s691 [#allocation11]
          %693 = vst [vmem:[%s692] sm:$0xff] %v690
        $region57: #{tpu_custom_call.1} parent=35 // loop_footer
          %s412 = sadd.s32 1, %s408
        $region58: #{tpu_custom_call.1} parent=35 // loop_footer_branch
          %407 = sbr.rel target = $region54
        $region59: #{tpu_custom_call.1} parent=35 // loop_exit
          _
        %s694 = sand.u32 %s126, 1
        %s695 = scalar_lea.sflag [#allocation4], %s694
        %s696 = sand.u32 %s126, 1
        %s697 = smul.addr %s696, 72
        %s698 = scalar_lea.vmem [#allocation11], %s697
        %s699 = sand.u32 %s152, 1
        %s700 = scalar_lea.sflag [#allocation13], %s699
        %s701 = sand.u32 %s152, 1
        %s702 = smul.addr %s701, 24
        %s703 = scalar_lea.vmem [#allocation12], %s702
        // Predicated region
        $region60: #{tpu_custom_call.1} parent=35 // pred_check
          %p704 = pneg %p136
        $region61: #{tpu_custom_call.1} parent=35 // pred_check_branch
          %706 = sbr.rel (%p704) target = $region63
        $region62: #{tpu_custom_call.1} parent=35 // pred_region
          #allocation15 [shape = 'u32[6]{0}', space=smem, size = 0x18, scoped, tag = 'DMA stride descriptor']
          %s707 = smul.u32 3, %s29
          %s709 = ssub.s32 1152, 1152
          %710 = vsyncadd %s695, %s709
          %s711 = smul.addr %s707, 128
          %s712 = scalar_lea.hbm %s4, %s711
          %s714 = sshll.u32 1, 14
          %s715 = sxor.u32 4294967295, %s714
          %s718 = sshll.u32 7, 18
          %s719 = sxor.u32 4294967295, %s718
          %s720 = sand.u32 0, %s719
          %s722 = sor.u32 %s720, 0
          %s724 = sshll.u32 3, 24
          %s725 = sxor.u32 4294967295, %s724
          %s726 = sand.u32 %s722, %s725
          %s728 = sor.u32 %s726, 0
          %s729 = sshll.u32 %s698, 4
          %s730 = int_to_ptr.vmem [resolvable:$true] %s729
          %736 = sst [smem:[#allocation15]] 384
          %s737 = scalar_lea.smem [#allocation15], 1
          %738 = sst [smem:[%s737]] 768
          %s739 = scalar_lea.smem [#allocation15], 2
          %740 = sst [smem:[%s739]] 3
          %s741 = scalar_lea.smem [#allocation15], 3
          %742 = sst [smem:[%s741]] 128
          %s743 = scalar_lea.smem [#allocation15], 4
          %744 = sst [smem:[%s743]] 128
          %s745 = scalar_lea.smem [#allocation15], 5
          %746 = sst [smem:[%s745]] 8
          %748 = dma.general %s730, 1152, %s712, %s695, [#allocation14], [#allocation15], %s728, 0
        $region63: #{tpu_custom_call.1} parent=35 // pred_fallthru
          _
        // Predicated region
        $region64: #{tpu_custom_call.1} parent=35 // pred_check
          %p749 = pneg %p162
        $region65: #{tpu_custom_call.1} parent=35 // pred_check_branch
          %751 = sbr.rel (%p749) target = $region67
        $region66: #{tpu_custom_call.1} parent=35 // pred_region
          %s752 = smul.u32 3, %s29
          %s754 = ssub.s32 384, 384
          %755 = vsyncadd %s700, %s754
          %s756 = smul.addr %s752, 128
          %s757 = scalar_lea.hbm %s5, %s756
          %s758 = sshll.u32 %s703, 4
          %s759 = int_to_ptr.vmem [resolvable:$true] %s758
          %764 = dma.vmem_to_hbm [thread:$0]  %s759, 384, %s757, %s700, 128, 128, 8
        $region67: #{tpu_custom_call.1} parent=35 // pred_fallthru
          _
      $region36: #{tpu_custom_call.1} parent=5 // pred_fallthru
        _
      %p765 = scmp.le.s32.totalorder 2, %s24
      // Predicated region
      $region68: #{tpu_custom_call.1} parent=5 // pred_check
        %p766 = pneg %p765
      $region69: #{tpu_custom_call.1} parent=5 // pred_check_branch
        %768 = sbr.rel (%p766) target = $region71
      $region70: #{tpu_custom_call.1} parent=5 // pred_region
        %s769 = ssub.s32 %s24, 2
        // Predicated region
        $region72: #{tpu_custom_call.1} parent=70 // pred_check
          %p770 = pneg %p142
        $region73: #{tpu_custom_call.1} parent=70 // pred_check_branch
          %772 = sbr.rel (%p770) target = $region75
        $region74: #{tpu_custom_call.1} parent=70 // pred_region
          %s773 = sand.u32 %s127, 1
          %s774 = scalar_lea.sflag [#allocation4], %s773
          %s775 = sand.u32 %s127, 1
          %s776 = smul.addr %s775, 72
          %s777 = scalar_lea.vmem [#allocation11], %s776
          %778 = dma.done %s774, 1152
        $region75: #{tpu_custom_call.1} parent=70 // pred_fallthru
          _
        // Predicated region
        $region76: #{tpu_custom_call.1} parent=70 // pred_check
          %p779 = pneg %p168
        $region77: #{tpu_custom_call.1} parent=70 // pred_check_branch
          %781 = sbr.rel (%p779) target = $region79
        $region78: #{tpu_custom_call.1} parent=70 // pred_region
          %s782 = sand.u32 %s153, 1
          %s783 = scalar_lea.sflag [#allocation13], %s782
          %s784 = sand.u32 %s153, 1
          %s785 = smul.addr %s784, 24
          %s786 = scalar_lea.vmem [#allocation12], %s785
          %787 = dma.done %s783, 384
        $region79: #{tpu_custom_call.1} parent=70 // pred_fallthru
          _
      $region71: #{tpu_custom_call.1} parent=5 // pred_fallthru
        _
    $region6: #{tpu_custom_call.1} parent=1 // loop_footer
      %s28 = sadd.s32 1, %s24
    $region7: #{tpu_custom_call.1} parent=1 // loop_footer_branch
      %23 = sbr.rel target = $region3
    $region8: #{tpu_custom_call.1} parent=1 // loop_exit
      _
    %788 = vsyncpa [#allocation3], 1
    %s789 = scalar_lea.sflag [#allocation3], 1
    %790 = vsyncpa %s789, 1
    %791 = vsyncpa [#allocation4], 1
    %s792 = scalar_lea.sflag [#allocation4], 1
    %793 = vsyncpa %s792, 1
    %794 = vsyncpa [#allocation13], 1
    %s795 = scalar_lea.sflag [#allocation13], 1
    %796 = vsyncpa %s795, 1
    %797 = vsyncpa [#allocation5], 1
    %s798 = scalar_lea.sflag [#allocation5], 1
    %799 = vsyncpa %s798, 1
    %800 = vsyncpa [#allocation6], 1
    %s801 = scalar_lea.sflag [#allocation6], 1
    %802 = vsyncpa %s801, 1
    %803 = vsyncpa [#allocation9], 1

</llo_original>
